<compile_context>
chip_gen: v5e
topology: v5e:2x2
jax: 0.10.0
libtpu: 0.0.40
codegen_flags: <defaults>
</compile_context>

<pallas_src>
import functools
import math

import jax
import jax.numpy as jnp
from jax import lax
from jax.experimental import pallas as pl
from jax.experimental.pallas import tpu as pltpu

# ----------------------- small BERT config (synthetic) -----------------------
VOCAB_SIZE = 100
MAX_POS = 32
TYPE_VOCAB = 2
HIDDEN = 32
NUM_HEADS = 2
HEAD_DIM = HIDDEN // NUM_HEADS
INTERMEDIATE = 64
NUM_LAYERS = 2
PROJ_OUT = 256
LN_EPS = 1e-12

PARAMS_PER_LAYER = 12  # wqkv, bqkv, wo, bo, ln1_g, ln1_b, w1, b1, w2, b2, ln2_g, ln2_b


# ------------------------------- fused kernel ---------------------------------
def fused_forward_kernel(*refs, batch, seq):
    """refs = (emb, mask, emb_ln_g, emb_ln_b, <12 per layer>, proj_w, proj_b, out)."""
    in_refs = refs[:-1]
    out_ref = refs[-1]

    it = iter(in_refs)
    emb_ref = next(it)
    mask_ref = next(it)
    eg_ref = next(it)
    eb_ref = next(it)
    layer_refs = [tuple(next(it) for _ in range(PARAMS_PER_LAYER))
                  for _ in range(NUM_LAYERS)]
    pw_ref = next(it)
    pb_ref = next(it)

    def layernorm(x, g_ref, b_ref):
        mean = jnp.mean(x, axis=-1, keepdims=True)
        var = jnp.mean(jnp.square(x - mean), axis=-1, keepdims=True)
        return (x - mean) * lax.rsqrt(var + LN_EPS) * g_ref[...] + b_ref[...]

    # additive attention mask rows, hoisted out of the layer loop
    mask = mask_ref[...]                                    # (batch, seq) f32
    mask_rows = [mask[b:b + 1, :] for b in range(batch)]    # (1, seq) each

    # embedding LayerNorm
    x = layernorm(emb_ref[...], eg_ref, eb_ref)             # (batch*seq, HIDDEN)

    for (wqkv_r, bqkv_r, wo_r, bo_r, g1_r, b1_r,
         w1_r, fb1_r, w2_r, fb2_r, g2_r, b2_r) in layer_refs:
        # fused Q/K/V projection: (M, H) @ (H, 3H); Q already pre-scaled by 1/sqrt(Dh)
        qkv = jnp.dot(x, wqkv_r[...], preferred_element_type=jnp.float32) + bqkv_r[...]
        q = qkv[:, 0:HIDDEN]
        k = qkv[:, HIDDEN:2 * HIDDEN]
        v = qkv[:, 2 * HIDDEN:3 * HIDDEN]
        wo = wo_r[...]

        # attention: statically unrolled over (batch, head); head-merge fused into
        # the output projection (accumulate head_out @ wo[head-slice]).
        attn_rows = []
        for b in range(batch):
            r0 = b * seq
            m_b = mask_rows[b]                               # (1, seq)
            acc = jnp.zeros((seq, HIDDEN), jnp.float32)
            for h in range(NUM_HEADS):
                c0 = h * HEAD_DIM
                qs = q[r0:r0 + seq, c0:c0 + HEAD_DIM]
                ks = k[r0:r0 + seq, c0:c0 + HEAD_DIM]
                vs = v[r0:r0 + seq, c0:c0 + HEAD_DIM]
                # q @ k^T via dot_general contracting last dims (no explicit transpose)
                s = lax.dot_general(qs, ks, (((1,), (1,)), ((), ())),
                                    preferred_element_type=jnp.float32)
                s = s + m_b
                s_max = jnp.max(s, axis=-1, keepdims=True)
                p = jnp.exp(s - s_max)
                p = p * pl.reciprocal(jnp.sum(p, axis=-1, keepdims=True), approx=True)
                head_out = jnp.dot(p, vs, preferred_element_type=jnp.float32)  # (S, Dh)
                acc = acc + jnp.dot(head_out, wo[c0:c0 + HEAD_DIM, :],
                                    preferred_element_type=jnp.float32)
            attn_rows.append(acc)

        # sublane-aligned (seq is a multiple of 8) concat keeps the slab in vregs
        attn_out = jnp.concatenate(attn_rows, axis=0) + bo_r[...]   # (M, H)
        x = layernorm(x + attn_out, g1_r, b1_r)                     # residual fused in LN

        # FFN
        h1 = jnp.dot(x, w1_r[...], preferred_element_type=jnp.float32) + fb1_r[...]
        h1 = jax.nn.gelu(h1, approximate=True)
        ffn = jnp.dot(h1, w2_r[...], preferred_element_type=jnp.float32) + fb2_r[...]
        x = layernorm(x + ffn, g2_r, b2_r)                          # residual fused in LN

    # final projection: lane-dense (M, 256) output store
    out_ref[...] = (jnp.dot(x, pw_ref[...], preferred_element_type=jnp.float32)
                    + pb_ref[...]).astype(out_ref.dtype)


# ------------------------------ parameter init --------------------------------
def _w(key, shape, std=0.02):
    return (std * jax.random.normal(key, shape)).astype(jnp.float32)


def init_params(seed=0):
    root = jax.random.PRNGKey(seed)
    kidx = [0]

    def nk():
        kidx[0] += 1
        return jax.random.fold_in(root, kidx[0])

    p = {
        "word_emb": _w(nk(), (VOCAB_SIZE, HIDDEN)),
        "pos_emb": _w(nk(), (MAX_POS, HIDDEN)),
        "type_emb": _w(nk(), (TYPE_VOCAB, HIDDEN)),
        "emb_ln_g": jnp.ones((HIDDEN,), jnp.float32),
        "emb_ln_b": jnp.zeros((HIDDEN,), jnp.float32),
        "layers": [],
        # proj: nn.Linear(hidden_size, 256)  (weights stored as (in, out))
        "proj_w": _w(nk(), (HIDDEN, PROJ_OUT)),
        "proj_b": jnp.zeros((PROJ_OUT,), jnp.float32),
        # self.linear = nn.Linear(256, 3) -- defined by the module but UNUSED in forward
        "linear_w": _w(nk(), (PROJ_OUT, 3)),
        "linear_b": jnp.zeros((3,), jnp.float32),
    }
    for _ in range(NUM_LAYERS):
        layer = {
            "wq": _w(nk(), (HIDDEN, HIDDEN)), "bq": jnp.zeros((HIDDEN,), jnp.float32),
            "wk": _w(nk(), (HIDDEN, HIDDEN)), "bk": jnp.zeros((HIDDEN,), jnp.float32),
            "wv": _w(nk(), (HIDDEN, HIDDEN)), "bv": jnp.zeros((HIDDEN,), jnp.float32),
            "wo": _w(nk(), (HIDDEN, HIDDEN)), "bo": jnp.zeros((HIDDEN,), jnp.float32),
            "ln1_g": jnp.ones((HIDDEN,), jnp.float32),
            "ln1_b": jnp.zeros((HIDDEN,), jnp.float32),
            "w1": _w(nk(), (HIDDEN, INTERMEDIATE)),
            "b1": jnp.zeros((INTERMEDIATE,), jnp.float32),
            "w2": _w(nk(), (INTERMEDIATE, HIDDEN)),
            "b2": jnp.zeros((HIDDEN,), jnp.float32),
            "ln2_g": jnp.ones((HIDDEN,), jnp.float32),
            "ln2_b": jnp.zeros((HIDDEN,), jnp.float32),
        }
        p["layers"].append(layer)
    return p


# ------------------------------ model forward ---------------------------------
@jax.jit
def char_embedding_forward(params, inputs_ids, inputs_masks, tokens_type_ids):
    """out_seq = proj(bert(...)[0]) -> (B, S, 256). One fused pallas_call."""
    B, S = inputs_ids.shape
    M = B * S
    scale = 1.0 / math.sqrt(HEAD_DIM)

    # embedding gathers stay in JAX glue (data-dependent gather); everything else fused
    emb = (jnp.take(params["word_emb"], inputs_ids, axis=0)
           + params["pos_emb"][:S][None, :, :]
           + jnp.take(params["type_emb"], tokens_type_ids, axis=0)).reshape(M, HIDDEN)

    # additive attention mask (B, S)
    mask_add = (1.0 - inputs_masks.astype(jnp.float32)) * -10000.0

    args = [emb, mask_add,
            params["emb_ln_g"].reshape(1, HIDDEN),
            params["emb_ln_b"].reshape(1, HIDDEN)]
    for lp in params["layers"]:
        # fold 1/sqrt(head_dim) into the Q slice of the fused QKV weights/bias
        wqkv = jnp.concatenate([lp["wq"] * scale, lp["wk"], lp["wv"]], axis=1)  # (H, 3H)
        bqkv = jnp.concatenate([lp["bq"] * scale, lp["bk"],
                                lp["bv"]]).reshape(1, 3 * HIDDEN)
        args += [wqkv, bqkv,
                 lp["wo"], lp["bo"].reshape(1, HIDDEN),
                 lp["ln1_g"].reshape(1, HIDDEN), lp["ln1_b"].reshape(1, HIDDEN),
                 lp["w1"], lp["b1"].reshape(1, INTERMEDIATE),
                 lp["w2"], lp["b2"].reshape(1, HIDDEN),
                 lp["ln2_g"].reshape(1, HIDDEN), lp["ln2_b"].reshape(1, HIDDEN)]
    args += [params["proj_w"], params["proj_b"].reshape(1, PROJ_OUT)]

    out = pl.pallas_call(
        functools.partial(fused_forward_kernel, batch=B, seq=S),
        out_shape=jax.ShapeDtypeStruct((M, PROJ_OUT), jnp.float32),
        in_specs=[pl.BlockSpec(memory_space=pltpu.MemorySpace.VMEM)] * len(args),
        out_specs=pl.BlockSpec(memory_space=pltpu.MemorySpace.VMEM),
    )(*args)
    return out.reshape(B, S, PROJ_OUT)


# ----------------------------------- main --------------------------------------
if __name__ == "__main__":
    B, S = 2, 8
    key = jax.random.PRNGKey(0)
    k_ids, k_type = jax.random.split(key)

    inputs_ids = jax.random.randint(k_ids, (B, S), 0, VOCAB_SIZE, dtype=jnp.int32)
    inputs_masks = jnp.ones((B, S), jnp.int32).at[1, 6:].set(0)  # pad last 2 of row 1
    tokens_type_ids = jax.random.randint(k_type, (B, S), 0, TYPE_VOCAB, dtype=jnp.int32)

    params = init_params(seed=0)

    out = char_embedding_forward(params, inputs_ids, inputs_masks, tokens_type_ids)
    out = jax.block_until_ready(out)

    assert out.shape == (B, S, PROJ_OUT) and out.dtype == jnp.float32
    assert bool(jnp.all(jnp.isfinite(out)))
    print("KERNEL_OK")
</pallas_src>

<mosaic_0001>
module attributes {stable_mosaic.version = 11 : i64} {
  func.func @fused_forward_kernel(%arg0: memref<16x32xf32, #tpu.memory_space<vmem>>, %arg1: memref<2x8xf32, #tpu.memory_space<vmem>>, %arg2: memref<1x32xf32, #tpu.memory_space<vmem>>, %arg3: memref<1x32xf32, #tpu.memory_space<vmem>>, %arg4: memref<32x96xf32, #tpu.memory_space<vmem>>, %arg5: memref<1x96xf32, #tpu.memory_space<vmem>>, %arg6: memref<32x32xf32, #tpu.memory_space<vmem>>, %arg7: memref<1x32xf32, #tpu.memory_space<vmem>>, %arg8: memref<1x32xf32, #tpu.memory_space<vmem>>, %arg9: memref<1x32xf32, #tpu.memory_space<vmem>>, %arg10: memref<32x64xf32, #tpu.memory_space<vmem>>, %arg11: memref<1x64xf32, #tpu.memory_space<vmem>>, %arg12: memref<64x32xf32, #tpu.memory_space<vmem>>, %arg13: memref<1x32xf32, #tpu.memory_space<vmem>>, %arg14: memref<1x32xf32, #tpu.memory_space<vmem>>, %arg15: memref<1x32xf32, #tpu.memory_space<vmem>>, %arg16: memref<32x96xf32, #tpu.memory_space<vmem>>, %arg17: memref<1x96xf32, #tpu.memory_space<vmem>>, %arg18: memref<32x32xf32, #tpu.memory_space<vmem>>, %arg19: memref<1x32xf32, #tpu.memory_space<vmem>>, %arg20: memref<1x32xf32, #tpu.memory_space<vmem>>, %arg21: memref<1x32xf32, #tpu.memory_space<vmem>>, %arg22: memref<32x64xf32, #tpu.memory_space<vmem>>, %arg23: memref<1x64xf32, #tpu.memory_space<vmem>>, %arg24: memref<64x32xf32, #tpu.memory_space<vmem>>, %arg25: memref<1x32xf32, #tpu.memory_space<vmem>>, %arg26: memref<1x32xf32, #tpu.memory_space<vmem>>, %arg27: memref<1x32xf32, #tpu.memory_space<vmem>>, %arg28: memref<32x256xf32, #tpu.memory_space<vmem>>, %arg29: memref<1x256xf32, #tpu.memory_space<vmem>>, %arg30: memref<16x256xf32, #tpu.memory_space<vmem>>) attributes {dimension_semantics = [], scalar_prefetch = 0 : i64, scratch_operands = 0 : i64, tpu.core_type = #tpu.core_type<tc>} {
    %c0 = arith.constant 0 : index
    %c0_0 = arith.constant 0 : index
    %0 = vector.load %arg1[%c0, %c0_0] : memref<2x8xf32, #tpu.memory_space<vmem>>, vector<2x8xf32>
    %1 = vector.extract_strided_slice %0 {offsets = [0, 0], sizes = [1, 8], strides = [1, 1]} : vector<2x8xf32> to vector<1x8xf32>
    %2 = vector.extract_strided_slice %0 {offsets = [1, 0], sizes = [1, 8], strides = [1, 1]} : vector<2x8xf32> to vector<1x8xf32>
    %c0_1 = arith.constant 0 : index
    %c0_2 = arith.constant 0 : index
    %3 = vector.load %arg0[%c0_1, %c0_2] : memref<16x32xf32, #tpu.memory_space<vmem>>, vector<16x32xf32>
    %cst = arith.constant dense<0.000000e+00> : vector<16xf32>
    %4 = vector.multi_reduction <add>, %3, %cst [1] : vector<16x32xf32> to vector<16xf32>
    %5 = vector.shape_cast %4 : vector<16xf32> to vector<16x1xf32>
    %cst_3 = arith.constant 3.200000e+01 : f32
    %6 = vector.broadcast %cst_3 : f32 to vector<16x1xf32>
    %7 = arith.divf %5, %6 : vector<16x1xf32>
    %8 = vector.broadcast %7 : vector<16x1xf32> to vector<16x32xf32>
    %9 = arith.subf %3, %8 : vector<16x32xf32>
    %10 = arith.mulf %9, %9 : vector<16x32xf32>
    %cst_4 = arith.constant dense<0.000000e+00> : vector<16xf32>
    %11 = vector.multi_reduction <add>, %10, %cst_4 [1] : vector<16x32xf32> to vector<16xf32>
    %12 = vector.shape_cast %11 : vector<16xf32> to vector<16x1xf32>
    %cst_5 = arith.constant 3.200000e+01 : f32
    %13 = vector.broadcast %cst_5 : f32 to vector<16x1xf32>
    %14 = arith.divf %12, %13 : vector<16x1xf32>
    %15 = vector.broadcast %7 : vector<16x1xf32> to vector<16x32xf32>
    %16 = arith.subf %3, %15 : vector<16x32xf32>
    %cst_6 = arith.constant 9.99999996E-13 : f32
    %17 = vector.broadcast %cst_6 : f32 to vector<16x1xf32>
    %18 = arith.addf %14, %17 : vector<16x1xf32>
    %19 = math.rsqrt %18 : vector<16x1xf32>
    %20 = vector.broadcast %19 : vector<16x1xf32> to vector<16x32xf32>
    %21 = arith.mulf %16, %20 : vector<16x32xf32>
    %c0_7 = arith.constant 0 : index
    %c0_8 = arith.constant 0 : index
    %22 = vector.load %arg2[%c0_7, %c0_8] : memref<1x32xf32, #tpu.memory_space<vmem>>, vector<1x32xf32>
    %23 = vector.broadcast %22 : vector<1x32xf32> to vector<16x32xf32>
    %24 = arith.mulf %21, %23 : vector<16x32xf32>
    %c0_9 = arith.constant 0 : index
    %c0_10 = arith.constant 0 : index
    %25 = vector.load %arg3[%c0_9, %c0_10] : memref<1x32xf32, #tpu.memory_space<vmem>>, vector<1x32xf32>
    %26 = vector.broadcast %25 : vector<1x32xf32> to vector<16x32xf32>
    %27 = arith.addf %24, %26 : vector<16x32xf32>
    %c0_11 = arith.constant 0 : index
    %c0_12 = arith.constant 0 : index
    %28 = vector.load %arg4[%c0_11, %c0_12] : memref<32x96xf32, #tpu.memory_space<vmem>>, vector<32x96xf32>
    %cst_13 = arith.constant dense<0.000000e+00> : vector<16x96xf32>
    %29 = tpu.matmul %27, %28, %cst_13 {dimension_numbers = #tpu.dot_dimension_numbers<[1], [0], [0], [1], [0, 0, 1, 1], [], []>} : vector<16x32xf32>, vector<32x96xf32>, vector<16x96xf32> -> vector<16x96xf32>
    %c0_14 = arith.constant 0 : index
    %c0_15 = arith.constant 0 : index
    %30 = vector.load %arg5[%c0_14, %c0_15] : memref<1x96xf32, #tpu.memory_space<vmem>>, vector<1x96xf32>
    %31 = vector.broadcast %30 : vector<1x96xf32> to vector<16x96xf32>
    %32 = arith.addf %29, %31 : vector<16x96xf32>
    %33 = vector.extract_strided_slice %32 {offsets = [0, 0], sizes = [16, 32], strides = [1, 1]} : vector<16x96xf32> to vector<16x32xf32>
    %34 = vector.extract_strided_slice %32 {offsets = [0, 32], sizes = [16, 32], strides = [1, 1]} : vector<16x96xf32> to vector<16x32xf32>
    %35 = vector.extract_strided_slice %32 {offsets = [0, 64], sizes = [16, 32], strides = [1, 1]} : vector<16x96xf32> to vector<16x32xf32>
    %c0_16 = arith.constant 0 : index
    %c0_17 = arith.constant 0 : index
    %36 = vector.load %arg6[%c0_16, %c0_17] : memref<32x32xf32, #tpu.memory_space<vmem>>, vector<32x32xf32>
    %cst_18 = arith.constant 0.000000e+00 : f32
    %37 = vector.broadcast %cst_18 : f32 to vector<8x32xf32>
    %38 = vector.extract_strided_slice %33 {offsets = [0, 0], sizes = [8, 16], strides = [1, 1]} : vector<16x32xf32> to vector<8x16xf32>
    %39 = vector.extract_strided_slice %34 {offsets = [0, 0], sizes = [8, 16], strides = [1, 1]} : vector<16x32xf32> to vector<8x16xf32>
    %40 = vector.extract_strided_slice %35 {offsets = [0, 0], sizes = [8, 16], strides = [1, 1]} : vector<16x32xf32> to vector<8x16xf32>
    %cst_19 = arith.constant dense<0.000000e+00> : vector<8x8xf32>
    %41 = tpu.matmul %38, %39, %cst_19 {dimension_numbers = #tpu.dot_dimension_numbers<[1], [1], [0], [0], [0, 0, 1, 0], [], []>} : vector<8x16xf32>, vector<8x16xf32>, vector<8x8xf32> -> vector<8x8xf32>
    %42 = vector.broadcast %1 : vector<1x8xf32> to vector<8x8xf32>
    %43 = arith.addf %41, %42 : vector<8x8xf32>
    %cst_20 = arith.constant dense<0xFF800000> : vector<8xf32>
    %44 = vector.multi_reduction <maximumf>, %43, %cst_20 [1] : vector<8x8xf32> to vector<8xf32>
    %45 = vector.shape_cast %44 : vector<8xf32> to vector<8x1xf32>
    %46 = vector.broadcast %45 : vector<8x1xf32> to vector<8x8xf32>
    %47 = arith.subf %43, %46 : vector<8x8xf32>
    %48 = math.exp %47 : vector<8x8xf32>
    %cst_21 = arith.constant dense<0.000000e+00> : vector<8xf32>
    %49 = vector.multi_reduction <add>, %48, %cst_21 [1] : vector<8x8xf32> to vector<8xf32>
    %50 = vector.shape_cast %49 : vector<8xf32> to vector<8x1xf32>
    %51 = tpu.reciprocal %50 {approx = true} : vector<8x1xf32> -> vector<8x1xf32>
    %52 = vector.broadcast %51 : vector<8x1xf32> to vector<8x8xf32>
    %53 = arith.mulf %48, %52 : vector<8x8xf32>
    %cst_22 = arith.constant dense<0.000000e+00> : vector<8x16xf32>
    %54 = tpu.matmul %53, %40, %cst_22 {dimension_numbers = #tpu.dot_dimension_numbers<[1], [0], [0], [1], [0, 0, 1, 1], [], []>} : vector<8x8xf32>, vector<8x16xf32>, vector<8x16xf32> -> vector<8x16xf32>
    %55 = vector.extract_strided_slice %36 {offsets = [0, 0], sizes = [16, 32], strides = [1, 1]} : vector<32x32xf32> to vector<16x32xf32>
    %cst_23 = arith.constant dense<0.000000e+00> : vector<8x32xf32>
    %56 = tpu.matmul %54, %55, %cst_23 {dimension_numbers = #tpu.dot_dimension_numbers<[1], [0], [0], [1], [0, 0, 1, 1], [], []>} : vector<8x16xf32>, vector<16x32xf32>, vector<8x32xf32> -> vector<8x32xf32>
    %57 = arith.addf %37, %56 : vector<8x32xf32>
    %58 = vector.extract_strided_slice %33 {offsets = [0, 16], sizes = [8, 16], strides = [1, 1]} : vector<16x32xf32> to vector<8x16xf32>
    %59 = vector.extract_strided_slice %34 {offsets = [0, 16], sizes = [8, 16], strides = [1, 1]} : vector<16x32xf32> to vector<8x16xf32>
    %60 = vector.extract_strided_slice %35 {offsets = [0, 16], sizes = [8, 16], strides = [1, 1]} : vector<16x32xf32> to vector<8x16xf32>
    %cst_24 = arith.constant dense<0.000000e+00> : vector<8x8xf32>
    %61 = tpu.matmul %58, %59, %cst_24 {dimension_numbers = #tpu.dot_dimension_numbers<[1], [1], [0], [0], [0, 0, 1, 0], [], []>} : vector<8x16xf32>, vector<8x16xf32>, vector<8x8xf32> -> vector<8x8xf32>
    %62 = vector.broadcast %1 : vector<1x8xf32> to vector<8x8xf32>
    %63 = arith.addf %61, %62 : vector<8x8xf32>
    %cst_25 = arith.constant dense<0xFF800000> : vector<8xf32>
    %64 = vector.multi_reduction <maximumf>, %63, %cst_25 [1] : vector<8x8xf32> to vector<8xf32>
    %65 = vector.shape_cast %64 : vector<8xf32> to vector<8x1xf32>
    %66 = vector.broadcast %65 : vector<8x1xf32> to vector<8x8xf32>
    %67 = arith.subf %63, %66 : vector<8x8xf32>
    %68 = math.exp %67 : vector<8x8xf32>
    %cst_26 = arith.constant dense<0.000000e+00> : vector<8xf32>
    %69 = vector.multi_reduction <add>, %68, %cst_26 [1] : vector<8x8xf32> to vector<8xf32>
    %70 = vector.shape_cast %69 : vector<8xf32> to vector<8x1xf32>
    %71 = tpu.reciprocal %70 {approx = true} : vector<8x1xf32> -> vector<8x1xf32>
    %72 = vector.broadcast %71 : vector<8x1xf32> to vector<8x8xf32>
    %73 = arith.mulf %68, %72 : vector<8x8xf32>
    %cst_27 = arith.constant dense<0.000000e+00> : vector<8x16xf32>
    %74 = tpu.matmul %73, %60, %cst_27 {dimension_numbers = #tpu.dot_dimension_numbers<[1], [0], [0], [1], [0, 0, 1, 1], [], []>} : vector<8x8xf32>, vector<8x16xf32>, vector<8x16xf32> -> vector<8x16xf32>
    %75 = vector.extract_strided_slice %36 {offsets = [16, 0], sizes = [16, 32], strides = [1, 1]} : vector<32x32xf32> to vector<16x32xf32>
    %cst_28 = arith.constant dense<0.000000e+00> : vector<8x32xf32>
    %76 = tpu.matmul %74, %75, %cst_28 {dimension_numbers = #tpu.dot_dimension_numbers<[1], [0], [0], [1], [0, 0, 1, 1], [], []>} : vector<8x16xf32>, vector<16x32xf32>, vector<8x32xf32> -> vector<8x32xf32>
    %77 = arith.addf %57, %76 : vector<8x32xf32>
    %cst_29 = arith.constant 0.000000e+00 : f32
    %78 = vector.broadcast %cst_29 : f32 to vector<8x32xf32>
    %79 = vector.extract_strided_slice %33 {offsets = [8, 0], sizes = [8, 16], strides = [1, 1]} : vector<16x32xf32> to vector<8x16xf32>
    %80 = vector.extract_strided_slice %34 {offsets = [8, 0], sizes = [8, 16], strides = [1, 1]} : vector<16x32xf32> to vector<8x16xf32>
    %81 = vector.extract_strided_slice %35 {offsets = [8, 0], sizes = [8, 16], strides = [1, 1]} : vector<16x32xf32> to vector<8x16xf32>
    %cst_30 = arith.constant dense<0.000000e+00> : vector<8x8xf32>
    %82 = tpu.matmul %79, %80, %cst_30 {dimension_numbers = #tpu.dot_dimension_numbers<[1], [1], [0], [0], [0, 0, 1, 0], [], []>} : vector<8x16xf32>, vector<8x16xf32>, vector<8x8xf32> -> vector<8x8xf32>
    %83 = vector.broadcast %2 : vector<1x8xf32> to vector<8x8xf32>
    %84 = arith.addf %82, %83 : vector<8x8xf32>
    %cst_31 = arith.constant dense<0xFF800000> : vector<8xf32>
    %85 = vector.multi_reduction <maximumf>, %84, %cst_31 [1] : vector<8x8xf32> to vector<8xf32>
    %86 = vector.shape_cast %85 : vector<8xf32> to vector<8x1xf32>
    %87 = vector.broadcast %86 : vector<8x1xf32> to vector<8x8xf32>
    %88 = arith.subf %84, %87 : vector<8x8xf32>
    %89 = math.exp %88 : vector<8x8xf32>
    %cst_32 = arith.constant dense<0.000000e+00> : vector<8xf32>
    %90 = vector.multi_reduction <add>, %89, %cst_32 [1] : vector<8x8xf32> to vector<8xf32>
    %91 = vector.shape_cast %90 : vector<8xf32> to vector<8x1xf32>
    %92 = tpu.reciprocal %91 {approx = true} : vector<8x1xf32> -> vector<8x1xf32>
    %93 = vector.broadcast %92 : vector<8x1xf32> to vector<8x8xf32>
    %94 = arith.mulf %89, %93 : vector<8x8xf32>
    %cst_33 = arith.constant dense<0.000000e+00> : vector<8x16xf32>
    %95 = tpu.matmul %94, %81, %cst_33 {dimension_numbers = #tpu.dot_dimension_numbers<[1], [0], [0], [1], [0, 0, 1, 1], [], []>} : vector<8x8xf32>, vector<8x16xf32>, vector<8x16xf32> -> vector<8x16xf32>
    %96 = vector.extract_strided_slice %36 {offsets = [0, 0], sizes = [16, 32], strides = [1, 1]} : vector<32x32xf32> to vector<16x32xf32>
    %cst_34 = arith.constant dense<0.000000e+00> : vector<8x32xf32>
    %97 = tpu.matmul %95, %96, %cst_34 {dimension_numbers = #tpu.dot_dimension_numbers<[1], [0], [0], [1], [0, 0, 1, 1], [], []>} : vector<8x16xf32>, vector<16x32xf32>, vector<8x32xf32> -> vector<8x32xf32>
    %98 = arith.addf %78, %97 : vector<8x32xf32>
    %99 = vector.extract_strided_slice %33 {offsets = [8, 16], sizes = [8, 16], strides = [1, 1]} : vector<16x32xf32> to vector<8x16xf32>
    %100 = vector.extract_strided_slice %34 {offsets = [8, 16], sizes = [8, 16], strides = [1, 1]} : vector<16x32xf32> to vector<8x16xf32>
    %101 = vector.extract_strided_slice %35 {offsets = [8, 16], sizes = [8, 16], strides = [1, 1]} : vector<16x32xf32> to vector<8x16xf32>
    %cst_35 = arith.constant dense<0.000000e+00> : vector<8x8xf32>
    %102 = tpu.matmul %99, %100, %cst_35 {dimension_numbers = #tpu.dot_dimension_numbers<[1], [1], [0], [0], [0, 0, 1, 0], [], []>} : vector<8x16xf32>, vector<8x16xf32>, vector<8x8xf32> -> vector<8x8xf32>
    %103 = vector.broadcast %2 : vector<1x8xf32> to vector<8x8xf32>
    %104 = arith.addf %102, %103 : vector<8x8xf32>
    %cst_36 = arith.constant dense<0xFF800000> : vector<8xf32>
    %105 = vector.multi_reduction <maximumf>, %104, %cst_36 [1] : vector<8x8xf32> to vector<8xf32>
    %106 = vector.shape_cast %105 : vector<8xf32> to vector<8x1xf32>
    %107 = vector.broadcast %106 : vector<8x1xf32> to vector<8x8xf32>
    %108 = arith.subf %104, %107 : vector<8x8xf32>
    %109 = math.exp %108 : vector<8x8xf32>
    %cst_37 = arith.constant dense<0.000000e+00> : vector<8xf32>
    %110 = vector.multi_reduction <add>, %109, %cst_37 [1] : vector<8x8xf32> to vector<8xf32>
    %111 = vector.shape_cast %110 : vector<8xf32> to vector<8x1xf32>
    %112 = tpu.reciprocal %111 {approx = true} : vector<8x1xf32> -> vector<8x1xf32>
    %113 = vector.broadcast %112 : vector<8x1xf32> to vector<8x8xf32>
    %114 = arith.mulf %109, %113 : vector<8x8xf32>
    %cst_38 = arith.constant dense<0.000000e+00> : vector<8x16xf32>
    %115 = tpu.matmul %114, %101, %cst_38 {dimension_numbers = #tpu.dot_dimension_numbers<[1], [0], [0], [1], [0, 0, 1, 1], [], []>} : vector<8x8xf32>, vector<8x16xf32>, vector<8x16xf32> -> vector<8x16xf32>
    %116 = vector.extract_strided_slice %36 {offsets = [16, 0], sizes = [16, 32], strides = [1, 1]} : vector<32x32xf32> to vector<16x32xf32>
    %cst_39 = arith.constant dense<0.000000e+00> : vector<8x32xf32>
    %117 = tpu.matmul %115, %116, %cst_39 {dimension_numbers = #tpu.dot_dimension_numbers<[1], [0], [0], [1], [0, 0, 1, 1], [], []>} : vector<8x16xf32>, vector<16x32xf32>, vector<8x32xf32> -> vector<8x32xf32>
    %118 = arith.addf %98, %117 : vector<8x32xf32>
    %119 = tpu.concatenate %77, %118 in 0 : vector<8x32xf32>, vector<8x32xf32> -> vector<16x32xf32>
    %c0_40 = arith.constant 0 : index
    %c0_41 = arith.constant 0 : index
    %120 = vector.load %arg7[%c0_40, %c0_41] : memref<1x32xf32, #tpu.memory_space<vmem>>, vector<1x32xf32>
    %121 = vector.broadcast %120 : vector<1x32xf32> to vector<16x32xf32>
    %122 = arith.addf %119, %121 : vector<16x32xf32>
    %123 = arith.addf %27, %122 : vector<16x32xf32>
    %cst_42 = arith.constant dense<0.000000e+00> : vector<16xf32>
    %124 = vector.multi_reduction <add>, %123, %cst_42 [1] : vector<16x32xf32> to vector<16xf32>
    %125 = vector.shape_cast %124 : vector<16xf32> to vector<16x1xf32>
    %cst_43 = arith.constant 3.200000e+01 : f32
    %126 = vector.broadcast %cst_43 : f32 to vector<16x1xf32>
    %127 = arith.divf %125, %126 : vector<16x1xf32>
    %128 = vector.broadcast %127 : vector<16x1xf32> to vector<16x32xf32>
    %129 = arith.subf %123, %128 : vector<16x32xf32>
    %130 = arith.mulf %129, %129 : vector<16x32xf32>
    %cst_44 = arith.constant dense<0.000000e+00> : vector<16xf32>
    %131 = vector.multi_reduction <add>, %130, %cst_44 [1] : vector<16x32xf32> to vector<16xf32>
    %132 = vector.shape_cast %131 : vector<16xf32> to vector<16x1xf32>
    %cst_45 = arith.constant 3.200000e+01 : f32
    %133 = vector.broadcast %cst_45 : f32 to vector<16x1xf32>
    %134 = arith.divf %132, %133 : vector<16x1xf32>
    %135 = vector.broadcast %127 : vector<16x1xf32> to vector<16x32xf32>
    %136 = arith.subf %123, %135 : vector<16x32xf32>
    %cst_46 = arith.constant 9.99999996E-13 : f32
    %137 = vector.broadcast %cst_46 : f32 to vector<16x1xf32>
    %138 = arith.addf %134, %137 : vector<16x1xf32>
    %139 = math.rsqrt %138 : vector<16x1xf32>
    %140 = vector.broadcast %139 : vector<16x1xf32> to vector<16x32xf32>
    %141 = arith.mulf %136, %140 : vector<16x32xf32>
    %c0_47 = arith.constant 0 : index
    %c0_48 = arith.constant 0 : index
    %142 = vector.load %arg8[%c0_47, %c0_48] : memref<1x32xf32, #tpu.memory_space<vmem>>, vector<1x32xf32>
    %143 = vector.broadcast %142 : vector<1x32xf32> to vector<16x32xf32>
    %144 = arith.mulf %141, %143 : vector<16x32xf32>
    %c0_49 = arith.constant 0 : index
    %c0_50 = arith.constant 0 : index
    %145 = vector.load %arg9[%c0_49, %c0_50] : memref<1x32xf32, #tpu.memory_space<vmem>>, vector<1x32xf32>
    %146 = vector.broadcast %145 : vector<1x32xf32> to vector<16x32xf32>
    %147 = arith.addf %144, %146 : vector<16x32xf32>
    %c0_51 = arith.constant 0 : index
    %c0_52 = arith.constant 0 : index
    %148 = vector.load %arg10[%c0_51, %c0_52] : memref<32x64xf32, #tpu.memory_space<vmem>>, vector<32x64xf32>
    %cst_53 = arith.constant dense<0.000000e+00> : vector<16x64xf32>
    %149 = tpu.matmul %147, %148, %cst_53 {dimension_numbers = #tpu.dot_dimension_numbers<[1], [0], [0], [1], [0, 0, 1, 1], [], []>} : vector<16x32xf32>, vector<32x64xf32>, vector<16x64xf32> -> vector<16x64xf32>
    %c0_54 = arith.constant 0 : index
    %c0_55 = arith.constant 0 : index
    %150 = vector.load %arg11[%c0_54, %c0_55] : memref<1x64xf32, #tpu.memory_space<vmem>>, vector<1x64xf32>
    %151 = vector.broadcast %150 : vector<1x64xf32> to vector<16x64xf32>
    %152 = arith.addf %149, %151 : vector<16x64xf32>
    %153 = arith.mulf %152, %152 : vector<16x64xf32>
    %154 = arith.mulf %152, %153 : vector<16x64xf32>
    %cst_56 = arith.constant 4.471500e-02 : f32
    %155 = vector.broadcast %cst_56 : f32 to vector<16x64xf32>
    %156 = arith.mulf %155, %154 : vector<16x64xf32>
    %157 = arith.addf %152, %156 : vector<16x64xf32>
    %cst_57 = arith.constant 0.797884583 : f32
    %158 = vector.broadcast %cst_57 : f32 to vector<16x64xf32>
    %159 = arith.mulf %158, %157 : vector<16x64xf32>
    %160 = math.tanh %159 : vector<16x64xf32>
    %cst_58 = arith.constant 1.000000e+00 : f32
    %161 = vector.broadcast %cst_58 : f32 to vector<16x64xf32>
    %162 = arith.addf %161, %160 : vector<16x64xf32>
    %cst_59 = arith.constant 5.000000e-01 : f32
    %163 = vector.broadcast %cst_59 : f32 to vector<16x64xf32>
    %164 = arith.mulf %163, %162 : vector<16x64xf32>
    %165 = arith.mulf %152, %164 : vector<16x64xf32>
    %c0_60 = arith.constant 0 : index
    %c0_61 = arith.constant 0 : index
    %166 = vector.load %arg12[%c0_60, %c0_61] : memref<64x32xf32, #tpu.memory_space<vmem>>, vector<64x32xf32>
    %cst_62 = arith.constant dense<0.000000e+00> : vector<16x32xf32>
    %167 = tpu.matmul %165, %166, %cst_62 {dimension_numbers = #tpu.dot_dimension_numbers<[1], [0], [0], [1], [0, 0, 1, 1], [], []>} : vector<16x64xf32>, vector<64x32xf32>, vector<16x32xf32> -> vector<16x32xf32>
    %c0_63 = arith.constant 0 : index
    %c0_64 = arith.constant 0 : index
    %168 = vector.load %arg13[%c0_63, %c0_64] : memref<1x32xf32, #tpu.memory_space<vmem>>, vector<1x32xf32>
    %169 = vector.broadcast %168 : vector<1x32xf32> to vector<16x32xf32>
    %170 = arith.addf %167, %169 : vector<16x32xf32>
    %171 = arith.addf %147, %170 : vector<16x32xf32>
    %cst_65 = arith.constant dense<0.000000e+00> : vector<16xf32>
    %172 = vector.multi_reduction <add>, %171, %cst_65 [1] : vector<16x32xf32> to vector<16xf32>
    %173 = vector.shape_cast %172 : vector<16xf32> to vector<16x1xf32>
    %cst_66 = arith.constant 3.200000e+01 : f32
    %174 = vector.broadcast %cst_66 : f32 to vector<16x1xf32>
    %175 = arith.divf %173, %174 : vector<16x1xf32>
    %176 = vector.broadcast %175 : vector<16x1xf32> to vector<16x32xf32>
    %177 = arith.subf %171, %176 : vector<16x32xf32>
    %178 = arith.mulf %177, %177 : vector<16x32xf32>
    %cst_67 = arith.constant dense<0.000000e+00> : vector<16xf32>
    %179 = vector.multi_reduction <add>, %178, %cst_67 [1] : vector<16x32xf32> to vector<16xf32>
    %180 = vector.shape_cast %179 : vector<16xf32> to vector<16x1xf32>
    %cst_68 = arith.constant 3.200000e+01 : f32
    %181 = vector.broadcast %cst_68 : f32 to vector<16x1xf32>
    %182 = arith.divf %180, %181 : vector<16x1xf32>
    %183 = vector.broadcast %175 : vector<16x1xf32> to vector<16x32xf32>
    %184 = arith.subf %171, %183 : vector<16x32xf32>
    %cst_69 = arith.constant 9.99999996E-13 : f32
    %185 = vector.broadcast %cst_69 : f32 to vector<16x1xf32>
    %186 = arith.addf %182, %185 : vector<16x1xf32>
    %187 = math.rsqrt %186 : vector<16x1xf32>
    %188 = vector.broadcast %187 : vector<16x1xf32> to vector<16x32xf32>
    %189 = arith.mulf %184, %188 : vector<16x32xf32>
    %c0_70 = arith.constant 0 : index
    %c0_71 = arith.constant 0 : index
    %190 = vector.load %arg14[%c0_70, %c0_71] : memref<1x32xf32, #tpu.memory_space<vmem>>, vector<1x32xf32>
    %191 = vector.broadcast %190 : vector<1x32xf32> to vector<16x32xf32>
    %192 = arith.mulf %189, %191 : vector<16x32xf32>
    %c0_72 = arith.constant 0 : index
    %c0_73 = arith.constant 0 : index
    %193 = vector.load %arg15[%c0_72, %c0_73] : memref<1x32xf32, #tpu.memory_space<vmem>>, vector<1x32xf32>
    %194 = vector.broadcast %193 : vector<1x32xf32> to vector<16x32xf32>
    %195 = arith.addf %192, %194 : vector<16x32xf32>
    %c0_74 = arith.constant 0 : index
    %c0_75 = arith.constant 0 : index
    %196 = vector.load %arg16[%c0_74, %c0_75] : memref<32x96xf32, #tpu.memory_space<vmem>>, vector<32x96xf32>
    %cst_76 = arith.constant dense<0.000000e+00> : vector<16x96xf32>
    %197 = tpu.matmul %195, %196, %cst_76 {dimension_numbers = #tpu.dot_dimension_numbers<[1], [0], [0], [1], [0, 0, 1, 1], [], []>} : vector<16x32xf32>, vector<32x96xf32>, vector<16x96xf32> -> vector<16x96xf32>
    %c0_77 = arith.constant 0 : index
    %c0_78 = arith.constant 0 : index
    %198 = vector.load %arg17[%c0_77, %c0_78] : memref<1x96xf32, #tpu.memory_space<vmem>>, vector<1x96xf32>
    %199 = vector.broadcast %198 : vector<1x96xf32> to vector<16x96xf32>
    %200 = arith.addf %197, %199 : vector<16x96xf32>
    %201 = vector.extract_strided_slice %200 {offsets = [0, 0], sizes = [16, 32], strides = [1, 1]} : vector<16x96xf32> to vector<16x32xf32>
    %202 = vector.extract_strided_slice %200 {offsets = [0, 32], sizes = [16, 32], strides = [1, 1]} : vector<16x96xf32> to vector<16x32xf32>
    %203 = vector.extract_strided_slice %200 {offsets = [0, 64], sizes = [16, 32], strides = [1, 1]} : vector<16x96xf32> to vector<16x32xf32>
    %c0_79 = arith.constant 0 : index
    %c0_80 = arith.constant 0 : index
    %204 = vector.load %arg18[%c0_79, %c0_80] : memref<32x32xf32, #tpu.memory_space<vmem>>, vector<32x32xf32>
    %cst_81 = arith.constant 0.000000e+00 : f32
    %205 = vector.broadcast %cst_81 : f32 to vector<8x32xf32>
    %206 = vector.extract_strided_slice %201 {offsets = [0, 0], sizes = [8, 16], strides = [1, 1]} : vector<16x32xf32> to vector<8x16xf32>
    %207 = vector.extract_strided_slice %202 {offsets = [0, 0], sizes = [8, 16], strides = [1, 1]} : vector<16x32xf32> to vector<8x16xf32>
    %208 = vector.extract_strided_slice %203 {offsets = [0, 0], sizes = [8, 16], strides = [1, 1]} : vector<16x32xf32> to vector<8x16xf32>
    %cst_82 = arith.constant dense<0.000000e+00> : vector<8x8xf32>
    %209 = tpu.matmul %206, %207, %cst_82 {dimension_numbers = #tpu.dot_dimension_numbers<[1], [1], [0], [0], [0, 0, 1, 0], [], []>} : vector<8x16xf32>, vector<8x16xf32>, vector<8x8xf32> -> vector<8x8xf32>
    %210 = vector.broadcast %1 : vector<1x8xf32> to vector<8x8xf32>
    %211 = arith.addf %209, %210 : vector<8x8xf32>
    %cst_83 = arith.constant dense<0xFF800000> : vector<8xf32>
    %212 = vector.multi_reduction <maximumf>, %211, %cst_83 [1] : vector<8x8xf32> to vector<8xf32>
    %213 = vector.shape_cast %212 : vector<8xf32> to vector<8x1xf32>
    %214 = vector.broadcast %213 : vector<8x1xf32> to vector<8x8xf32>
    %215 = arith.subf %211, %214 : vector<8x8xf32>
    %216 = math.exp %215 : vector<8x8xf32>
    %cst_84 = arith.constant dense<0.000000e+00> : vector<8xf32>
    %217 = vector.multi_reduction <add>, %216, %cst_84 [1] : vector<8x8xf32> to vector<8xf32>
    %218 = vector.shape_cast %217 : vector<8xf32> to vector<8x1xf32>
    %219 = tpu.reciprocal %218 {approx = true} : vector<8x1xf32> -> vector<8x1xf32>
    %220 = vector.broadcast %219 : vector<8x1xf32> to vector<8x8xf32>
    %221 = arith.mulf %216, %220 : vector<8x8xf32>
    %cst_85 = arith.constant dense<0.000000e+00> : vector<8x16xf32>
    %222 = tpu.matmul %221, %208, %cst_85 {dimension_numbers = #tpu.dot_dimension_numbers<[1], [0], [0], [1], [0, 0, 1, 1], [], []>} : vector<8x8xf32>, vector<8x16xf32>, vector<8x16xf32> -> vector<8x16xf32>
    %223 = vector.extract_strided_slice %204 {offsets = [0, 0], sizes = [16, 32], strides = [1, 1]} : vector<32x32xf32> to vector<16x32xf32>
    %cst_86 = arith.constant dense<0.000000e+00> : vector<8x32xf32>
    %224 = tpu.matmul %222, %223, %cst_86 {dimension_numbers = #tpu.dot_dimension_numbers<[1], [0], [0], [1], [0, 0, 1, 1], [], []>} : vector<8x16xf32>, vector<16x32xf32>, vector<8x32xf32> -> vector<8x32xf32>
    %225 = arith.addf %205, %224 : vector<8x32xf32>
    %226 = vector.extract_strided_slice %201 {offsets = [0, 16], sizes = [8, 16], strides = [1, 1]} : vector<16x32xf32> to vector<8x16xf32>
    %227 = vector.extract_strided_slice %202 {offsets = [0, 16], sizes = [8, 16], strides = [1, 1]} : vector<16x32xf32> to vector<8x16xf32>
    %228 = vector.extract_strided_slice %203 {offsets = [0, 16], sizes = [8, 16], strides = [1, 1]} : vector<16x32xf32> to vector<8x16xf32>
    %cst_87 = arith.constant dense<0.000000e+00> : vector<8x8xf32>
    %229 = tpu.matmul %226, %227, %cst_87 {dimension_numbers = #tpu.dot_dimension_numbers<[1], [1], [0], [0], [0, 0, 1, 0], [], []>} : vector<8x16xf32>, vector<8x16xf32>, vector<8x8xf32> -> vector<8x8xf32>
    %230 = vector.broadcast %1 : vector<1x8xf32> to vector<8x8xf32>
    %231 = arith.addf %229, %230 : vector<8x8xf32>
    %cst_88 = arith.constant dense<0xFF800000> : vector<8xf32>
    %232 = vector.multi_reduction <maximumf>, %231, %cst_88 [1] : vector<8x8xf32> to vector<8xf32>
    %233 = vector.shape_cast %232 : vector<8xf32> to vector<8x1xf32>
    %234 = vector.broadcast %233 : vector<8x1xf32> to vector<8x8xf32>
    %235 = arith.subf %231, %234 : vector<8x8xf32>
    %236 = math.exp %235 : vector<8x8xf32>
    %cst_89 = arith.constant dense<0.000000e+00> : vector<8xf32>
    %237 = vector.multi_reduction <add>, %236, %cst_89 [1] : vector<8x8xf32> to vector<8xf32>
    %238 = vector.shape_cast %237 : vector<8xf32> to vector<8x1xf32>
    %239 = tpu.reciprocal %238 {approx = true} : vector<8x1xf32> -> vector<8x1xf32>
    %240 = vector.broadcast %239 : vector<8x1xf32> to vector<8x8xf32>
    %241 = arith.mulf %236, %240 : vector<8x8xf32>
    %cst_90 = arith.constant dense<0.000000e+00> : vector<8x16xf32>
    %242 = tpu.matmul %241, %228, %cst_90 {dimension_numbers = #tpu.dot_dimension_numbers<[1], [0], [0], [1], [0, 0, 1, 1], [], []>} : vector<8x8xf32>, vector<8x16xf32>, vector<8x16xf32> -> vector<8x16xf32>
    %243 = vector.extract_strided_slice %204 {offsets = [16, 0], sizes = [16, 32], strides = [1, 1]} : vector<32x32xf32> to vector<16x32xf32>
    %cst_91 = arith.constant dense<0.000000e+00> : vector<8x32xf32>
    %244 = tpu.matmul %242, %243, %cst_91 {dimension_numbers = #tpu.dot_dimension_numbers<[1], [0], [0], [1], [0, 0, 1, 1], [], []>} : vector<8x16xf32>, vector<16x32xf32>, vector<8x32xf32> -> vector<8x32xf32>
    %245 = arith.addf %225, %244 : vector<8x32xf32>
    %cst_92 = arith.constant 0.000000e+00 : f32
    %246 = vector.broadcast %cst_92 : f32 to vector<8x32xf32>
    %247 = vector.extract_strided_slice %201 {offsets = [8, 0], sizes = [8, 16], strides = [1, 1]} : vector<16x32xf32> to vector<8x16xf32>
    %248 = vector.extract_strided_slice %202 {offsets = [8, 0], sizes = [8, 16], strides = [1, 1]} : vector<16x32xf32> to vector<8x16xf32>
    %249 = vector.extract_strided_slice %203 {offsets = [8, 0], sizes = [8, 16], strides = [1, 1]} : vector<16x32xf32> to vector<8x16xf32>
    %cst_93 = arith.constant dense<0.000000e+00> : vector<8x8xf32>
    %250 = tpu.matmul %247, %248, %cst_93 {dimension_numbers = #tpu.dot_dimension_numbers<[1], [1], [0], [0], [0, 0, 1, 0], [], []>} : vector<8x16xf32>, vector<8x16xf32>, vector<8x8xf32> -> vector<8x8xf32>
    %251 = vector.broadcast %2 : vector<1x8xf32> to vector<8x8xf32>
    %252 = arith.addf %250, %251 : vector<8x8xf32>
    %cst_94 = arith.constant dense<0xFF800000> : vector<8xf32>
    %253 = vector.multi_reduction <maximumf>, %252, %cst_94 [1] : vector<8x8xf32> to vector<8xf32>
    %254 = vector.shape_cast %253 : vector<8xf32> to vector<8x1xf32>
    %255 = vector.broadcast %254 : vector<8x1xf32> to vector<8x8xf32>
    %256 = arith.subf %252, %255 : vector<8x8xf32>
    %257 = math.exp %256 : vector<8x8xf32>
    %cst_95 = arith.constant dense<0.000000e+00> : vector<8xf32>
    %258 = vector.multi_reduction <add>, %257, %cst_95 [1] : vector<8x8xf32> to vector<8xf32>
    %259 = vector.shape_cast %258 : vector<8xf32> to vector<8x1xf32>
    %260 = tpu.reciprocal %259 {approx = true} : vector<8x1xf32> -> vector<8x1xf32>
    %261 = vector.broadcast %260 : vector<8x1xf32> to vector<8x8xf32>
    %262 = arith.mulf %257, %261 : vector<8x8xf32>
    %cst_96 = arith.constant dense<0.000000e+00> : vector<8x16xf32>
    %263 = tpu.matmul %262, %249, %cst_96 {dimension_numbers = #tpu.dot_dimension_numbers<[1], [0], [0], [1], [0, 0, 1, 1], [], []>} : vector<8x8xf32>, vector<8x16xf32>, vector<8x16xf32> -> vector<8x16xf32>
    %264 = vector.extract_strided_slice %204 {offsets = [0, 0], sizes = [16, 32], strides = [1, 1]} : vector<32x32xf32> to vector<16x32xf32>
    %cst_97 = arith.constant dense<0.000000e+00> : vector<8x32xf32>
    %265 = tpu.matmul %263, %264, %cst_97 {dimension_numbers = #tpu.dot_dimension_numbers<[1], [0], [0], [1], [0, 0, 1, 1], [], []>} : vector<8x16xf32>, vector<16x32xf32>, vector<8x32xf32> -> vector<8x32xf32>
    %266 = arith.addf %246, %265 : vector<8x32xf32>
    %267 = vector.extract_strided_slice %201 {offsets = [8, 16], sizes = [8, 16], strides = [1, 1]} : vector<16x32xf32> to vector<8x16xf32>
    %268 = vector.extract_strided_slice %202 {offsets = [8, 16], sizes = [8, 16], strides = [1, 1]} : vector<16x32xf32> to vector<8x16xf32>
    %269 = vector.extract_strided_slice %203 {offsets = [8, 16], sizes = [8, 16], strides = [1, 1]} : vector<16x32xf32> to vector<8x16xf32>
    %cst_98 = arith.constant dense<0.000000e+00> : vector<8x8xf32>
    %270 = tpu.matmul %267, %268, %cst_98 {dimension_numbers = #tpu.dot_dimension_numbers<[1], [1], [0], [0], [0, 0, 1, 0], [], []>} : vector<8x16xf32>, vector<8x16xf32>, vector<8x8xf32> -> vector<8x8xf32>
    %271 = vector.broadcast %2 : vector<1x8xf32> to vector<8x8xf32>
    %272 = arith.addf %270, %271 : vector<8x8xf32>
    %cst_99 = arith.constant dense<0xFF800000> : vector<8xf32>
    %273 = vector.multi_reduction <maximumf>, %272, %cst_99 [1] : vector<8x8xf32> to vector<8xf32>
    %274 = vector.shape_cast %273 : vector<8xf32> to vector<8x1xf32>
    %275 = vector.broadcast %274 : vector<8x1xf32> to vector<8x8xf32>
    %276 = arith.subf %272, %275 : vector<8x8xf32>
    %277 = math.exp %276 : vector<8x8xf32>
    %cst_100 = arith.constant dense<0.000000e+00> : vector<8xf32>
    %278 = vector.multi_reduction <add>, %277, %cst_100 [1] : vector<8x8xf32> to vector<8xf32>
    %279 = vector.shape_cast %278 : vector<8xf32> to vector<8x1xf32>
    %280 = tpu.reciprocal %279 {approx = true} : vector<8x1xf32> -> vector<8x1xf32>
    %281 = vector.broadcast %280 : vector<8x1xf32> to vector<8x8xf32>
    %282 = arith.mulf %277, %281 : vector<8x8xf32>
    %cst_101 = arith.constant dense<0.000000e+00> : vector<8x16xf32>
    %283 = tpu.matmul %282, %269, %cst_101 {dimension_numbers = #tpu.dot_dimension_numbers<[1], [0], [0], [1], [0, 0, 1, 1], [], []>} : vector<8x8xf32>, vector<8x16xf32>, vector<8x16xf32> -> vector<8x16xf32>
    %284 = vector.extract_strided_slice %204 {offsets = [16, 0], sizes = [16, 32], strides = [1, 1]} : vector<32x32xf32> to vector<16x32xf32>
    %cst_102 = arith.constant dense<0.000000e+00> : vector<8x32xf32>
    %285 = tpu.matmul %283, %284, %cst_102 {dimension_numbers = #tpu.dot_dimension_numbers<[1], [0], [0], [1], [0, 0, 1, 1], [], []>} : vector<8x16xf32>, vector<16x32xf32>, vector<8x32xf32> -> vector<8x32xf32>
    %286 = arith.addf %266, %285 : vector<8x32xf32>
    %287 = tpu.concatenate %245, %286 in 0 : vector<8x32xf32>, vector<8x32xf32> -> vector<16x32xf32>
    %c0_103 = arith.constant 0 : index
    %c0_104 = arith.constant 0 : index
    %288 = vector.load %arg19[%c0_103, %c0_104] : memref<1x32xf32, #tpu.memory_space<vmem>>, vector<1x32xf32>
    %289 = vector.broadcast %288 : vector<1x32xf32> to vector<16x32xf32>
    %290 = arith.addf %287, %289 : vector<16x32xf32>
    %291 = arith.addf %195, %290 : vector<16x32xf32>
    %cst_105 = arith.constant dense<0.000000e+00> : vector<16xf32>
    %292 = vector.multi_reduction <add>, %291, %cst_105 [1] : vector<16x32xf32> to vector<16xf32>
    %293 = vector.shape_cast %292 : vector<16xf32> to vector<16x1xf32>
    %cst_106 = arith.constant 3.200000e+01 : f32
    %294 = vector.broadcast %cst_106 : f32 to vector<16x1xf32>
    %295 = arith.divf %293, %294 : vector<16x1xf32>
    %296 = vector.broadcast %295 : vector<16x1xf32> to vector<16x32xf32>
    %297 = arith.subf %291, %296 : vector<16x32xf32>
    %298 = arith.mulf %297, %297 : vector<16x32xf32>
    %cst_107 = arith.constant dense<0.000000e+00> : vector<16xf32>
    %299 = vector.multi_reduction <add>, %298, %cst_107 [1] : vector<16x32xf32> to vector<16xf32>
    %300 = vector.shape_cast %299 : vector<16xf32> to vector<16x1xf32>
    %cst_108 = arith.constant 3.200000e+01 : f32
    %301 = vector.broadcast %cst_108 : f32 to vector<16x1xf32>
    %302 = arith.divf %300, %301 : vector<16x1xf32>
    %303 = vector.broadcast %295 : vector<16x1xf32> to vector<16x32xf32>
    %304 = arith.subf %291, %303 : vector<16x32xf32>
    %cst_109 = arith.constant 9.99999996E-13 : f32
    %305 = vector.broadcast %cst_109 : f32 to vector<16x1xf32>
    %306 = arith.addf %302, %305 : vector<16x1xf32>
    %307 = math.rsqrt %306 : vector<16x1xf32>
    %308 = vector.broadcast %307 : vector<16x1xf32> to vector<16x32xf32>
    %309 = arith.mulf %304, %308 : vector<16x32xf32>
    %c0_110 = arith.constant 0 : index
    %c0_111 = arith.constant 0 : index
    %310 = vector.load %arg20[%c0_110, %c0_111] : memref<1x32xf32, #tpu.memory_space<vmem>>, vector<1x32xf32>
    %311 = vector.broadcast %310 : vector<1x32xf32> to vector<16x32xf32>
    %312 = arith.mulf %309, %311 : vector<16x32xf32>
    %c0_112 = arith.constant 0 : index
    %c0_113 = arith.constant 0 : index
    %313 = vector.load %arg21[%c0_112, %c0_113] : memref<1x32xf32, #tpu.memory_space<vmem>>, vector<1x32xf32>
    %314 = vector.broadcast %313 : vector<1x32xf32> to vector<16x32xf32>
    %315 = arith.addf %312, %314 : vector<16x32xf32>
    %c0_114 = arith.constant 0 : index
    %c0_115 = arith.constant 0 : index
    %316 = vector.load %arg22[%c0_114, %c0_115] : memref<32x64xf32, #tpu.memory_space<vmem>>, vector<32x64xf32>
    %cst_116 = arith.constant dense<0.000000e+00> : vector<16x64xf32>
    %317 = tpu.matmul %315, %316, %cst_116 {dimension_numbers = #tpu.dot_dimension_numbers<[1], [0], [0], [1], [0, 0, 1, 1], [], []>} : vector<16x32xf32>, vector<32x64xf32>, vector<16x64xf32> -> vector<16x64xf32>
    %c0_117 = arith.constant 0 : index
    %c0_118 = arith.constant 0 : index
    %318 = vector.load %arg23[%c0_117, %c0_118] : memref<1x64xf32, #tpu.memory_space<vmem>>, vector<1x64xf32>
    %319 = vector.broadcast %318 : vector<1x64xf32> to vector<16x64xf32>
    %320 = arith.addf %317, %319 : vector<16x64xf32>
    %321 = arith.mulf %320, %320 : vector<16x64xf32>
    %322 = arith.mulf %320, %321 : vector<16x64xf32>
    %cst_119 = arith.constant 4.471500e-02 : f32
    %323 = vector.broadcast %cst_119 : f32 to vector<16x64xf32>
    %324 = arith.mulf %323, %322 : vector<16x64xf32>
    %325 = arith.addf %320, %324 : vector<16x64xf32>
    %cst_120 = arith.constant 0.797884583 : f32
    %326 = vector.broadcast %cst_120 : f32 to vector<16x64xf32>
    %327 = arith.mulf %326, %325 : vector<16x64xf32>
    %328 = math.tanh %327 : vector<16x64xf32>
    %cst_121 = arith.constant 1.000000e+00 : f32
    %329 = vector.broadcast %cst_121 : f32 to vector<16x64xf32>
    %330 = arith.addf %329, %328 : vector<16x64xf32>
    %cst_122 = arith.constant 5.000000e-01 : f32
    %331 = vector.broadcast %cst_122 : f32 to vector<16x64xf32>
    %332 = arith.mulf %331, %330 : vector<16x64xf32>
    %333 = arith.mulf %320, %332 : vector<16x64xf32>
    %c0_123 = arith.constant 0 : index
    %c0_124 = arith.constant 0 : index
    %334 = vector.load %arg24[%c0_123, %c0_124] : memref<64x32xf32, #tpu.memory_space<vmem>>, vector<64x32xf32>
    %cst_125 = arith.constant dense<0.000000e+00> : vector<16x32xf32>
    %335 = tpu.matmul %333, %334, %cst_125 {dimension_numbers = #tpu.dot_dimension_numbers<[1], [0], [0], [1], [0, 0, 1, 1], [], []>} : vector<16x64xf32>, vector<64x32xf32>, vector<16x32xf32> -> vector<16x32xf32>
    %c0_126 = arith.constant 0 : index
    %c0_127 = arith.constant 0 : index
    %336 = vector.load %arg25[%c0_126, %c0_127] : memref<1x32xf32, #tpu.memory_space<vmem>>, vector<1x32xf32>
    %337 = vector.broadcast %336 : vector<1x32xf32> to vector<16x32xf32>
    %338 = arith.addf %335, %337 : vector<16x32xf32>
    %339 = arith.addf %315, %338 : vector<16x32xf32>
    %cst_128 = arith.constant dense<0.000000e+00> : vector<16xf32>
    %340 = vector.multi_reduction <add>, %339, %cst_128 [1] : vector<16x32xf32> to vector<16xf32>
    %341 = vector.shape_cast %340 : vector<16xf32> to vector<16x1xf32>
    %cst_129 = arith.constant 3.200000e+01 : f32
    %342 = vector.broadcast %cst_129 : f32 to vector<16x1xf32>
    %343 = arith.divf %341, %342 : vector<16x1xf32>
    %344 = vector.broadcast %343 : vector<16x1xf32> to vector<16x32xf32>
    %345 = arith.subf %339, %344 : vector<16x32xf32>
    %346 = arith.mulf %345, %345 : vector<16x32xf32>
    %cst_130 = arith.constant dense<0.000000e+00> : vector<16xf32>
    %347 = vector.multi_reduction <add>, %346, %cst_130 [1] : vector<16x32xf32> to vector<16xf32>
    %348 = vector.shape_cast %347 : vector<16xf32> to vector<16x1xf32>
    %cst_131 = arith.constant 3.200000e+01 : f32
    %349 = vector.broadcast %cst_131 : f32 to vector<16x1xf32>
    %350 = arith.divf %348, %349 : vector<16x1xf32>
    %351 = vector.broadcast %343 : vector<16x1xf32> to vector<16x32xf32>
    %352 = arith.subf %339, %351 : vector<16x32xf32>
    %cst_132 = arith.constant 9.99999996E-13 : f32
    %353 = vector.broadcast %cst_132 : f32 to vector<16x1xf32>
    %354 = arith.addf %350, %353 : vector<16x1xf32>
    %355 = math.rsqrt %354 : vector<16x1xf32>
    %356 = vector.broadcast %355 : vector<16x1xf32> to vector<16x32xf32>
    %357 = arith.mulf %352, %356 : vector<16x32xf32>
    %c0_133 = arith.constant 0 : index
    %c0_134 = arith.constant 0 : index
    %358 = vector.load %arg26[%c0_133, %c0_134] : memref<1x32xf32, #tpu.memory_space<vmem>>, vector<1x32xf32>
    %359 = vector.broadcast %358 : vector<1x32xf32> to vector<16x32xf32>
    %360 = arith.mulf %357, %359 : vector<16x32xf32>
    %c0_135 = arith.constant 0 : index
    %c0_136 = arith.constant 0 : index
    %361 = vector.load %arg27[%c0_135, %c0_136] : memref<1x32xf32, #tpu.memory_space<vmem>>, vector<1x32xf32>
    %362 = vector.broadcast %361 : vector<1x32xf32> to vector<16x32xf32>
    %363 = arith.addf %360, %362 : vector<16x32xf32>
    %c0_137 = arith.constant 0 : index
    %c0_138 = arith.constant 0 : index
    %364 = vector.load %arg28[%c0_137, %c0_138] : memref<32x256xf32, #tpu.memory_space<vmem>>, vector<32x256xf32>
    %cst_139 = arith.constant dense<0.000000e+00> : vector<16x256xf32>
    %365 = tpu.matmul %363, %364, %cst_139 {dimension_numbers = #tpu.dot_dimension_numbers<[1], [0], [0], [1], [0, 0, 1, 1], [], []>} : vector<16x32xf32>, vector<32x256xf32>, vector<16x256xf32> -> vector<16x256xf32>
    %c0_140 = arith.constant 0 : index
    %c0_141 = arith.constant 0 : index
    %366 = vector.load %arg29[%c0_140, %c0_141] : memref<1x256xf32, #tpu.memory_space<vmem>>, vector<1x256xf32>
    %367 = vector.broadcast %366 : vector<1x256xf32> to vector<16x256xf32>
    %368 = arith.addf %365, %367 : vector<16x256xf32>
    %c0_142 = arith.constant 0 : index
    %c0_143 = arith.constant 0 : index
    %369 = vector.load %arg30[%c0_142, %c0_143] : memref<16x256xf32, #tpu.memory_space<vmem>>, vector<16x256xf32>
    tpu.vector_store %arg30[%c0_142, %c0_143], %368 {strides = array<i32>} : memref<16x256xf32, #tpu.memory_space<vmem>>, vector<16x256xf32>,
    return
  }
}

</mosaic_0001>

<llo_original>
// kernel: char_embedding_forward.1
$region0: #{char_embedding_forward.1}
  #allocation0 [shape = 'u32[]', space=smem, size = 0x4, offset = 0x4, fixed_abs, tag = 'smem constant byte address 0x4 - core index']
  #allocation1 [shape = 'u32[72,128]{1,0:T(1,128)}', space=vmem, size = 0x9000, scoped, tag = 'internal scratch']
  %s0 = inlined_call_operand.smem [shape: u32[31], index: -1, kind: input, shape index: {}]
  %s1 = sld [smem:[%s0]]
  %s2 = scalar_lea.smem %s0, 1
  %s3 = sld [smem:[%s2]]
  %s4 = scalar_lea.smem %s0, 2
  %s5 = sld [smem:[%s4]]
  %s6 = scalar_lea.smem %s0, 3
  %s7 = sld [smem:[%s6]]
  %s8 = scalar_lea.smem %s0, 4
  %s9 = sld [smem:[%s8]]
  %s10 = scalar_lea.smem %s0, 5
  %s11 = sld [smem:[%s10]]
  %s12 = scalar_lea.smem %s0, 6
  %s13 = sld [smem:[%s12]]
  %s14 = scalar_lea.smem %s0, 7
  %s15 = sld [smem:[%s14]]
  %s16 = scalar_lea.smem %s0, 8
  %s17 = sld [smem:[%s16]]
  %s18 = scalar_lea.smem %s0, 9
  %s19 = sld [smem:[%s18]]
  %s20 = scalar_lea.smem %s0, 10
  %s21 = sld [smem:[%s20]]
  %s22 = scalar_lea.smem %s0, 11
  %s23 = sld [smem:[%s22]]
  %s24 = scalar_lea.smem %s0, 12
  %s25 = sld [smem:[%s24]]
  %s26 = scalar_lea.smem %s0, 13
  %s27 = sld [smem:[%s26]]
  %s28 = scalar_lea.smem %s0, 14
  %s29 = sld [smem:[%s28]]
  %s30 = scalar_lea.smem %s0, 15
  %s31 = sld [smem:[%s30]]
  %s32 = scalar_lea.smem %s0, 16
  %s33 = sld [smem:[%s32]]
  %s34 = scalar_lea.smem %s0, 17
  %s35 = sld [smem:[%s34]]
  %s36 = scalar_lea.smem %s0, 18
  %s37 = sld [smem:[%s36]]
  %s38 = scalar_lea.smem %s0, 19
  %s39 = sld [smem:[%s38]]
  %s40 = scalar_lea.smem %s0, 20
  %s41 = sld [smem:[%s40]]
  %s42 = scalar_lea.smem %s0, 21
  %s43 = sld [smem:[%s42]]
  %s44 = scalar_lea.smem %s0, 22
  %s45 = sld [smem:[%s44]]
  %s46 = scalar_lea.smem %s0, 23
  %s47 = sld [smem:[%s46]]
  %s48 = scalar_lea.smem %s0, 24
  %s49 = sld [smem:[%s48]]
  %s50 = scalar_lea.smem %s0, 25
  %s51 = sld [smem:[%s50]]
  %s52 = scalar_lea.smem %s0, 26
  %s53 = sld [smem:[%s52]]
  %s54 = scalar_lea.smem %s0, 27
  %s55 = sld [smem:[%s54]]
  %s56 = scalar_lea.smem %s0, 28
  %s57 = sld [smem:[%s56]]
  %s58 = scalar_lea.smem %s0, 29
  %s59 = sld [smem:[%s58]]
  %s60 = scalar_lea.smem %s0, 30
  %s61 = sld [smem:[%s60]]
  %s62 = sld [smem:[#allocation0]]
  $region130: #{char_embedding_forward.1} parent=0
    _
  %s64 = ssub.s32 1, %s62
  %s65 = scalar_select 0, %s64, %s62
  $region1: #{char_embedding_forward.1} parent=0
    #allocation2 [shape = 'u8[16384]{0}', space=vmem, size = 0x4000, scoped, tag = 'output window, operand 0, single buffered']
    #allocation3 [shape = 's32[1]{0}', space=sflag, size = 0x4, scoped, tag = 'scoped memory for char_embedding_forward.1']
    %66 = vsyncpa [#allocation3], 0
    // Predicated region
    $region2: #{char_embedding_forward.1} parent=1 // pred_check
      _
    $region3: #{char_embedding_forward.1} parent=1 // pred_check_branch
      %68 = sbr.rel (0) target = $region5
    $region4: #{char_embedding_forward.1} parent=1 // pred_region
      _
    $region5: #{char_embedding_forward.1} parent=1 // pred_fallthru
      _
    // Predicated region
    $region6: #{char_embedding_forward.1} parent=1 // pred_check
      _
    $region7: #{char_embedding_forward.1} parent=1 // pred_check_branch
      %70 = sbr.rel (0) target = $region9
    $region8: #{char_embedding_forward.1} parent=1 // pred_region
      _
    $region9: #{char_embedding_forward.1} parent=1 // pred_fallthru
      _
    // Predicated region
    $region10: #{char_embedding_forward.1} parent=1 // pred_check
      _
    $region11: #{char_embedding_forward.1} parent=1 // pred_check_branch
      %72 = sbr.rel (0) target = $region13
    $region12: #{char_embedding_forward.1} parent=1 // pred_region
      _
    $region13: #{char_embedding_forward.1} parent=1 // pred_fallthru
      _
    // Predicated region
    $region14: #{char_embedding_forward.1} parent=1 // pred_check
      _
    $region15: #{char_embedding_forward.1} parent=1 // pred_check_branch
      %74 = sbr.rel (0) target = $region17
    $region16: #{char_embedding_forward.1} parent=1 // pred_region
      _
    $region17: #{char_embedding_forward.1} parent=1 // pred_fallthru
      _
    // Predicated region
    $region18: #{char_embedding_forward.1} parent=1 // pred_check
      _
    $region19: #{char_embedding_forward.1} parent=1 // pred_check_branch
      %76 = sbr.rel (0) target = $region21
    $region20: #{char_embedding_forward.1} parent=1 // pred_region
      _
    $region21: #{char_embedding_forward.1} parent=1 // pred_fallthru
      _
    // Predicated region
    $region22: #{char_embedding_forward.1} parent=1 // pred_check
      _
    $region23: #{char_embedding_forward.1} parent=1 // pred_check_branch
      %78 = sbr.rel (0) target = $region25
    $region24: #{char_embedding_forward.1} parent=1 // pred_region
      _
    $region25: #{char_embedding_forward.1} parent=1 // pred_fallthru
      _
    // Predicated region
    $region26: #{char_embedding_forward.1} parent=1 // pred_check
      _
    $region27: #{char_embedding_forward.1} parent=1 // pred_check_branch
      %80 = sbr.rel (0) target = $region29
    $region28: #{char_embedding_forward.1} parent=1 // pred_region
      _
    $region29: #{char_embedding_forward.1} parent=1 // pred_fallthru
      _
    // Predicated region
    $region30: #{char_embedding_forward.1} parent=1 // pred_check
      _
    $region31: #{char_embedding_forward.1} parent=1 // pred_check_branch
      %82 = sbr.rel (0) target = $region33
    $region32: #{char_embedding_forward.1} parent=1 // pred_region
      _
    $region33: #{char_embedding_forward.1} parent=1 // pred_fallthru
      _
    // Predicated region
    $region34: #{char_embedding_forward.1} parent=1 // pred_check
      _
    $region35: #{char_embedding_forward.1} parent=1 // pred_check_branch
      %84 = sbr.rel (0) target = $region37
    $region36: #{char_embedding_forward.1} parent=1 // pred_region
      _
    $region37: #{char_embedding_forward.1} parent=1 // pred_fallthru
      _
    // Predicated region
    $region38: #{char_embedding_forward.1} parent=1 // pred_check
      _
    $region39: #{char_embedding_forward.1} parent=1 // pred_check_branch
      %86 = sbr.rel (0) target = $region41
    $region40: #{char_embedding_forward.1} parent=1 // pred_region
      _
    $region41: #{char_embedding_forward.1} parent=1 // pred_fallthru
      _
    // Predicated region
    $region42: #{char_embedding_forward.1} parent=1 // pred_check
      _
    $region43: #{char_embedding_forward.1} parent=1 // pred_check_branch
      %88 = sbr.rel (0) target = $region45
    $region44: #{char_embedding_forward.1} parent=1 // pred_region
      _
    $region45: #{char_embedding_forward.1} parent=1 // pred_fallthru
      _
    // Predicated region
    $region46: #{char_embedding_forward.1} parent=1 // pred_check
      _
    $region47: #{char_embedding_forward.1} parent=1 // pred_check_branch
      %90 = sbr.rel (0) target = $region49
    $region48: #{char_embedding_forward.1} parent=1 // pred_region
      _
    $region49: #{char_embedding_forward.1} parent=1 // pred_fallthru
      _
    // Predicated region
    $region50: #{char_embedding_forward.1} parent=1 // pred_check
      _
    $region51: #{char_embedding_forward.1} parent=1 // pred_check_branch
      %92 = sbr.rel (0) target = $region53
    $region52: #{char_embedding_forward.1} parent=1 // pred_region
      _
    $region53: #{char_embedding_forward.1} parent=1 // pred_fallthru
      _
    // Predicated region
    $region54: #{char_embedding_forward.1} parent=1 // pred_check
      _
    $region55: #{char_embedding_forward.1} parent=1 // pred_check_branch
      %94 = sbr.rel (0) target = $region57
    $region56: #{char_embedding_forward.1} parent=1 // pred_region
      _
    $region57: #{char_embedding_forward.1} parent=1 // pred_fallthru
      _
    // Predicated region
    $region58: #{char_embedding_forward.1} parent=1 // pred_check
      _
    $region59: #{char_embedding_forward.1} parent=1 // pred_check_branch
      %96 = sbr.rel (0) target = $region61
    $region60: #{char_embedding_forward.1} parent=1 // pred_region
      _
    $region61: #{char_embedding_forward.1} parent=1 // pred_fallthru
      _
    // Predicated region
    $region62: #{char_embedding_forward.1} parent=1 // pred_check
      _
    $region63: #{char_embedding_forward.1} parent=1 // pred_check_branch
      %98 = sbr.rel (0) target = $region65
    $region64: #{char_embedding_forward.1} parent=1 // pred_region
      _
    $region65: #{char_embedding_forward.1} parent=1 // pred_fallthru
      _
    // Predicated region
    $region66: #{char_embedding_forward.1} parent=1 // pred_check
      _
    $region67: #{char_embedding_forward.1} parent=1 // pred_check_branch
      %100 = sbr.rel (0) target = $region69
    $region68: #{char_embedding_forward.1} parent=1 // pred_region
      _
    $region69: #{char_embedding_forward.1} parent=1 // pred_fallthru
      _
    // Predicated region
    $region70: #{char_embedding_forward.1} parent=1 // pred_check
      _
    $region71: #{char_embedding_forward.1} parent=1 // pred_check_branch
      %102 = sbr.rel (0) target = $region73
    $region72: #{char_embedding_forward.1} parent=1 // pred_region
      _
    $region73: #{char_embedding_forward.1} parent=1 // pred_fallthru
      _
    // Predicated region
    $region74: #{char_embedding_forward.1} parent=1 // pred_check
      _
    $region75: #{char_embedding_forward.1} parent=1 // pred_check_branch
      %104 = sbr.rel (0) target = $region77
    $region76: #{char_embedding_forward.1} parent=1 // pred_region
      _
    $region77: #{char_embedding_forward.1} parent=1 // pred_fallthru
      _
    // Predicated region
    $region78: #{char_embedding_forward.1} parent=1 // pred_check
      _
    $region79: #{char_embedding_forward.1} parent=1 // pred_check_branch
      %106 = sbr.rel (0) target = $region81
    $region80: #{char_embedding_forward.1} parent=1 // pred_region
      _
    $region81: #{char_embedding_forward.1} parent=1 // pred_fallthru
      _
    // Predicated region
    $region82: #{char_embedding_forward.1} parent=1 // pred_check
      _
    $region83: #{char_embedding_forward.1} parent=1 // pred_check_branch
      %108 = sbr.rel (0) target = $region85
    $region84: #{char_embedding_forward.1} parent=1 // pred_region
      _
    $region85: #{char_embedding_forward.1} parent=1 // pred_fallthru
      _
    // Predicated region
    $region86: #{char_embedding_forward.1} parent=1 // pred_check
      _
    $region87: #{char_embedding_forward.1} parent=1 // pred_check_branch
      %110 = sbr.rel (0) target = $region89
    $region88: #{char_embedding_forward.1} parent=1 // pred_region
      _
    $region89: #{char_embedding_forward.1} parent=1 // pred_fallthru
      _
    // Predicated region
    $region90: #{char_embedding_forward.1} parent=1 // pred_check
      _
    $region91: #{char_embedding_forward.1} parent=1 // pred_check_branch
      %112 = sbr.rel (0) target = $region93
    $region92: #{char_embedding_forward.1} parent=1 // pred_region
      _
    $region93: #{char_embedding_forward.1} parent=1 // pred_fallthru
      _
    // Predicated region
    $region94: #{char_embedding_forward.1} parent=1 // pred_check
      _
    $region95: #{char_embedding_forward.1} parent=1 // pred_check_branch
      %114 = sbr.rel (0) target = $region97
    $region96: #{char_embedding_forward.1} parent=1 // pred_region
      _
    $region97: #{char_embedding_forward.1} parent=1 // pred_fallthru
      _
    // Predicated region
    $region98: #{char_embedding_forward.1} parent=1 // pred_check
      _
    $region99: #{char_embedding_forward.1} parent=1 // pred_check_branch
      %116 = sbr.rel (0) target = $region101
    $region100: #{char_embedding_forward.1} parent=1 // pred_region
      _
    $region101: #{char_embedding_forward.1} parent=1 // pred_fallthru
      _
    // Predicated region
    $region102: #{char_embedding_forward.1} parent=1 // pred_check
      _
    $region103: #{char_embedding_forward.1} parent=1 // pred_check_branch
      %118 = sbr.rel (0) target = $region105
    $region104: #{char_embedding_forward.1} parent=1 // pred_region
      _
    $region105: #{char_embedding_forward.1} parent=1 // pred_fallthru
      _
    // Predicated region
    $region106: #{char_embedding_forward.1} parent=1 // pred_check
      _
    $region107: #{char_embedding_forward.1} parent=1 // pred_check_branch
      %120 = sbr.rel (0) target = $region109
    $region108: #{char_embedding_forward.1} parent=1 // pred_region
      _
    $region109: #{char_embedding_forward.1} parent=1 // pred_fallthru
      _
    // Predicated region
    $region110: #{char_embedding_forward.1} parent=1 // pred_check
      _
    $region111: #{char_embedding_forward.1} parent=1 // pred_check_branch
      %122 = sbr.rel (0) target = $region113
    $region112: #{char_embedding_forward.1} parent=1 // pred_region
      _
    $region113: #{char_embedding_forward.1} parent=1 // pred_fallthru
      _
    // Predicated region
    $region114: #{char_embedding_forward.1} parent=1 // pred_check
      _
    $region115: #{char_embedding_forward.1} parent=1 // pred_check_branch
      %124 = sbr.rel (0) target = $region117
    $region116: #{char_embedding_forward.1} parent=1 // pred_region
      _
    $region117: #{char_embedding_forward.1} parent=1 // pred_fallthru
      _
    // Predicated region
    $region118: #{char_embedding_forward.1} parent=1 // pred_check
      _
    $region119: #{char_embedding_forward.1} parent=1 // pred_check_branch
      %126 = sbr.rel (0) target = $region121
    $region120: #{char_embedding_forward.1} parent=1 // pred_region
      _
    $region121: #{char_embedding_forward.1} parent=1 // pred_fallthru
      _
    %v127 = vld [vmem:[%s3] sm:$0x3]
    %v128 = vld [vmem:[%s1] sm:$0xff]
    %v129 = vld [vmem:[%s1 + $0x8] sm:$0xff]
    %vm130 = vcmask 261120
    %v131 = vsel %vm130, %v128, 0.0
    %132 = vadd.xlane.f32.xlu0 %v131
    %v133 = vpop.xlane.xlu0 %132
    %v134 = vsel %vm130, %v129, 0.0
    %135 = vadd.xlane.f32.xlu0 %v134
    %v136 = vpop.xlane.xlu0 %135
    %v137 = vrcp.pop 32.0
    %v138 = vmul.f32 32.0, %v137
    %v139 = vsub.f32 1.0, %v138
    %v140 = vmul.f32 %v137, %v139
    %v141 = vadd.f32 %v137, %v140
    %vm142 = vweird.f32 %v137
    %v143 = vsel %vm142, %v137, %v141
    %v144 = vmul.f32 %v133, %v143
    %v145 = vmul.f32 %v136, %v143
    %v146 = vsub.f32 %v128, %v144
    %v147 = vsub.f32 %v129, %v145
    %v148 = vmul.f32 %v146, %v146
    %v149 = vmul.f32 %v147, %v147
    %v150 = vsel %vm130, %v148, 0.0
    %151 = vadd.xlane.f32.xlu0 %v150
    %v152 = vpop.xlane.xlu0 %151
    %v153 = vsel %vm130, %v149, 0.0
    %154 = vadd.xlane.f32.xlu0 %v153
    %v155 = vpop.xlane.xlu0 %154
    %v156 = vmul.f32 %v152, %v143
    %v157 = vmul.f32 %v155, %v143
    %v158 = vadd.f32 %v156, 1e-12
    %v159 = vadd.f32 %v157, 1e-12
    %v160 = vrsqrt.pop %v158
    %v161 = vmul.f32 %v160, %v158
    %v162 = vmul.f32 %v161, %v160
    %v163 = vmul.f32 0.5, %v162
    %v164 = vsub.f32 1.5, %v163
    %v165 = vmul.f32 %v160, %v164
    %vm166 = vweird.f32 %v158
    %vm167 = vweird.f32 %v160
    %vm168 = vmor %vm166, %vm167
    %v169 = vsel %vm168, %v160, %v165
    %v170 = vrsqrt.pop %v159
    %v171 = vmul.f32 %v170, %v159
    %v172 = vmul.f32 %v171, %v170
    %v173 = vmul.f32 0.5, %v172
    %v174 = vsub.f32 1.5, %v173
    %v175 = vmul.f32 %v170, %v174
    %vm176 = vweird.f32 %v159
    %vm177 = vweird.f32 %v170
    %vm178 = vmor %vm176, %vm177
    %v179 = vsel %vm178, %v170, %v175
    %v180 = vmul.f32 %v146, %v169
    %v181 = vmul.f32 %v147, %v179
    %v182 = vld [vmem:[%s5] sm:$0x1]
    %v184 = vperm.slane %v182, 0
    %v186 = vmul.f32 %v180, %v184
    %v187 = vmul.f32 %v181, %v184
    %v188 = vld [vmem:[%s7] sm:$0x1]
    %v190 = vperm.slane %v188, 0
    %v192 = vadd.f32 %v186, %v190
    %v193 = vadd.f32 %v187, %v190
    %v194 = vld [vmem:[%s9] sm:$0xff]
    %v195 = vld [vmem:[%s9 + $0x8] sm:$0xff]
    %v196 = vld [vmem:[%s9 + $0x10] sm:$0xff]
    %v197 = vld [vmem:[%s9 + $0x18] sm:$0xff]
    %v198 = vld [vmem:[%s11] sm:$0x1]
    %v200 = vperm.slane %v198, 0
    %v203 = vsel %vm130, %v192, 0
    %v206 = vsel %vm130, %v193, 0
    %208 = vmatpush.msra.mxu0 0.0
    %209 = vmatpush.msra.mxu0 0.0
    %210 = vmatpush.msra.mxu0 0.0
    %211 = vmatpush.msra.mxu0 0.0
    %212 = vmatpush.msra.mxu0 0.0
    %213 = vmatpush.msra.mxu0 0.0
    %214 = vmatpush.msra.mxu0 0.0
    %215 = vmatpush.msra.mxu0 0.0
    %216 = vmatpush.msra.mxu0 0.0
    %217 = vmatpush.msra.mxu0 0.0
    %218 = vmatpush.msra.mxu0 0.0
    %219 = vmatpush.msra.mxu0 0.0
    %220 = vmatpush.msra.mxu0 %v197
    %221 = vmatpush.msra.mxu0 %v196
    %222 = vmatpush.msra.mxu0 %v195
    %223 = vmatpush.msra.mxu0 %v194
    %224 = vmatmul.f32.gmra.mxu0 %v203
    %v225 = vpop.f32.mrf.mxu0
    %v226 = vadd.f32 %v200, %v225
    %227 = vmatmul.f32.gmra.mxu0 %v206
    %v228 = vpop.f32.mrf.mxu0
    %v229 = vadd.f32 %v200, %v228
    %230 = vdwg.mxu0
    %v231 = vld [vmem:[%s13] sm:$0xff]
    %v232 = vld [vmem:[%s13 + $0x8] sm:$0xff]
    %v233 = vld [vmem:[%s13 + $0x10] sm:$0xff]
    %v234 = vld [vmem:[%s13 + $0x18] sm:$0xff]
    %v235 = vperm.slane %v127, 0
    %237 = vrot.lane.b32.xlu0 %v226, 96
    %v238 = vpop.permute.xlu0 %237
    %vm239 = vcmask 130048
    %v240 = vsel %vm239, %v226, 0
    %v242 = vsel %vm239, %v238, 0
    %244 = vmatpush.xpose.msra.mxu0 0.0
    %245 = vmatpush.xpose.msra.mxu0 0.0
    %246 = vmatpush.xpose.msra.mxu0 0.0
    %247 = vmatpush.xpose.msra.mxu0 0.0
    %248 = vmatpush.xpose.msra.mxu0 0.0
    %249 = vmatpush.xpose.msra.mxu0 0.0
    %250 = vmatpush.xpose.msra.mxu0 0.0
    %251 = vmatpush.xpose.msra.mxu0 0.0
    %252 = vmatpush.xpose.msra.mxu0 0.0
    %253 = vmatpush.xpose.msra.mxu0 0.0
    %254 = vmatpush.xpose.msra.mxu0 0.0
    %255 = vmatpush.xpose.msra.mxu0 0.0
    %256 = vmatpush.xpose.msra.mxu0 0.0
    %257 = vmatpush.xpose.msra.mxu0 0.0
    %258 = vmatpush.xpose.msra.mxu0 0.0
    %259 = vmatpush.xpose.msra.mxu0 %v242
    %260 = vmatmul.f32.gmra.mxu0 %v240
    %v261 = vpop.f32.mrf.mxu0
    %v262 = vadd.f32 %v235, %v261
    %263 = vdwg.mxu0
    %vm264 = vcmask 64512
    %v265 = vsel %vm264, %v262, -inf
    %266 = vmax.xlane.f32.xlu0 %v265
    %v267 = vpop.xlane.xlu0 %266
    %v268 = vsub.f32 %v262, %v267
    %v269 = vmul.f32 %v268, 1.442695
    %v270 = vpow.pop %v269
    %v271 = vsel %vm264, %v270, 0.0
    %272 = vadd.xlane.f32.xlu0 %v271
    %v273 = vpop.xlane.xlu0 %272
    %v274 = vrcp.pop %v273
    %v275 = vmul.f32 %v270, %v274
    %276 = vrot.lane.b32.xlu0 %v226, 64
    %v277 = vpop.permute.xlu0 %276
    %v280 = vsel %vm264, %v275, 0
    %282 = vmatpush.msra.mxu0 0.0
    %283 = vmatpush.msra.mxu0 0.0
    %284 = vmatpush.msra.mxu0 0.0
    %285 = vmatpush.msra.mxu0 0.0
    %286 = vmatpush.msra.mxu0 0.0
    %287 = vmatpush.msra.mxu0 0.0
    %288 = vmatpush.msra.mxu0 0.0
    %289 = vmatpush.msra.mxu0 0.0
    %290 = vmatpush.msra.mxu0 0.0
    %291 = vmatpush.msra.mxu0 0.0
    %292 = vmatpush.msra.mxu0 0.0
    %293 = vmatpush.msra.mxu0 0.0
    %294 = vmatpush.msra.mxu0 0.0
    %295 = vmatpush.msra.mxu0 0.0
    %296 = vmatpush.msra.mxu0 0.0
    %297 = vmatpush.msra.mxu0 %v277
    %298 = vmatmul.f32.gmra.mxu0 %v280
    %v299 = vpop.f32.mrf.mxu0
    %v300 = vadd.f32 0.0, %v299
    %301 = vdwg.mxu0
    %302 = vrot.lane.b32.xlu0 %v226, 112
    %v303 = vpop.permute.xlu0 %302
    %304 = vrot.lane.b32.xlu0 %v226, 80
    %v305 = vpop.permute.xlu0 %304
    %v306 = vsel %vm239, %v303, 0
    %v308 = vsel %vm239, %v305, 0
    %310 = vmatpush.xpose.msra.mxu0 0.0
    %311 = vmatpush.xpose.msra.mxu0 0.0
    %312 = vmatpush.xpose.msra.mxu0 0.0
    %313 = vmatpush.xpose.msra.mxu0 0.0
    %314 = vmatpush.xpose.msra.mxu0 0.0
    %315 = vmatpush.xpose.msra.mxu0 0.0
    %316 = vmatpush.xpose.msra.mxu0 0.0
    %317 = vmatpush.xpose.msra.mxu0 0.0
    %318 = vmatpush.xpose.msra.mxu0 0.0
    %319 = vmatpush.xpose.msra.mxu0 0.0
    %320 = vmatpush.xpose.msra.mxu0 0.0
    %321 = vmatpush.xpose.msra.mxu0 0.0
    %322 = vmatpush.xpose.msra.mxu0 0.0
    %323 = vmatpush.xpose.msra.mxu0 0.0
    %324 = vmatpush.xpose.msra.mxu0 0.0
    %325 = vmatpush.xpose.msra.mxu0 %v308
    %326 = vmatmul.f32.gmra.mxu0 %v306
    %v327 = vpop.f32.mrf.mxu0
    %v328 = vadd.f32 %v235, %v327
    %329 = vdwg.mxu0
    %v330 = vsel %vm264, %v328, -inf
    %331 = vmax.xlane.f32.xlu0 %v330
    %v332 = vpop.xlane.xlu0 %331
    %v333 = vsub.f32 %v328, %v332
    %v334 = vmul.f32 %v333, 1.442695
    %v335 = vpow.pop %v334
    %v336 = vsel %vm264, %v335, 0.0
    %337 = vadd.xlane.f32.xlu0 %v336
    %v338 = vpop.xlane.xlu0 %337
    %v339 = vrcp.pop %v338
    %v340 = vmul.f32 %v335, %v339
    %341 = vrot.lane.b32.xlu0 %v226, 48
    %v342 = vpop.permute.xlu0 %341
    %v345 = vsel %vm264, %v340, 0
    %347 = vmatpush.msra.mxu0 0.0
    %348 = vmatpush.msra.mxu0 0.0
    %349 = vmatpush.msra.mxu0 0.0
    %350 = vmatpush.msra.mxu0 0.0
    %351 = vmatpush.msra.mxu0 0.0
    %352 = vmatpush.msra.mxu0 0.0
    %353 = vmatpush.msra.mxu0 0.0
    %354 = vmatpush.msra.mxu0 0.0
    %355 = vmatpush.msra.mxu0 0.0
    %356 = vmatpush.msra.mxu0 0.0
    %357 = vmatpush.msra.mxu0 0.0
    %358 = vmatpush.msra.mxu0 0.0
    %359 = vmatpush.msra.mxu0 0.0
    %360 = vmatpush.msra.mxu0 0.0
    %361 = vmatpush.msra.mxu0 0.0
    %362 = vmatpush.msra.mxu0 %v342
    %363 = vmatmul.f32.gmra.mxu0 %v345
    %v364 = vpop.f32.mrf.mxu0
    %v365 = vadd.f32 0.0, %v364
    %366 = vdwg.mxu0
    %v368 = vsel %vm239, %v365, 0
    %370 = vmatpush.msra.mxu0 0.0
    %371 = vmatpush.msra.mxu0 0.0
    %372 = vmatpush.msra.mxu0 0.0
    %373 = vmatpush.msra.mxu0 0.0
    %374 = vmatpush.msra.mxu0 0.0
    %375 = vmatpush.msra.mxu0 0.0
    %376 = vmatpush.msra.mxu0 0.0
    %377 = vmatpush.msra.mxu0 0.0
    %378 = vmatpush.msra.mxu0 0.0
    %379 = vmatpush.msra.mxu0 0.0
    %380 = vmatpush.msra.mxu0 0.0
    %381 = vmatpush.msra.mxu0 0.0
    %382 = vmatpush.msra.mxu0 0.0
    %383 = vmatpush.msra.mxu0 0.0
    %384 = vmatpush.msra.mxu0 %v234
    %385 = vmatpush.msra.mxu0 %v233
    %386 = vmatmul.f32.gmra.mxu0 %v368
    %v387 = vpop.f32.mrf.mxu0
    %v388 = vadd.f32 0.0, %v387
    %389 = vdwg.mxu0
    %v391 = vsel %vm239, %v300, 0
    %393 = vmatpush.msra.mxu0 0.0
    %394 = vmatpush.msra.mxu0 0.0
    %395 = vmatpush.msra.mxu0 0.0
    %396 = vmatpush.msra.mxu0 0.0
    %397 = vmatpush.msra.mxu0 0.0
    %398 = vmatpush.msra.mxu0 0.0
    %399 = vmatpush.msra.mxu0 0.0
    %400 = vmatpush.msra.mxu0 0.0
    %401 = vmatpush.msra.mxu0 0.0
    %402 = vmatpush.msra.mxu0 0.0
    %403 = vmatpush.msra.mxu0 0.0
    %404 = vmatpush.msra.mxu0 0.0
    %405 = vmatpush.msra.mxu0 0.0
    %406 = vmatpush.msra.mxu0 0.0
    %407 = vmatpush.msra.mxu0 %v232
    %408 = vmatpush.msra.mxu0 %v231
    %409 = vmatmul.f32.gmra.mxu0 %v391
    %v410 = vpop.f32.mrf.mxu0
    %v411 = vadd.f32 %v388, %v410
    %412 = vdwg.mxu0
    %v413 = vperm.slane %v127, 1
    %415 = vrot.lane.b32.xlu0 %v229, 96
    %v416 = vpop.permute.xlu0 %415
    %v417 = vsel %vm239, %v229, 0
    %v419 = vsel %vm239, %v416, 0
    %421 = vmatpush.xpose.msra.mxu0 0.0
    %422 = vmatpush.xpose.msra.mxu0 0.0
    %423 = vmatpush.xpose.msra.mxu0 0.0
    %424 = vmatpush.xpose.msra.mxu0 0.0
    %425 = vmatpush.xpose.msra.mxu0 0.0
    %426 = vmatpush.xpose.msra.mxu0 0.0
    %427 = vmatpush.xpose.msra.mxu0 0.0
    %428 = vmatpush.xpose.msra.mxu0 0.0
    %429 = vmatpush.xpose.msra.mxu0 0.0
    %430 = vmatpush.xpose.msra.mxu0 0.0
    %431 = vmatpush.xpose.msra.mxu0 0.0
    %432 = vmatpush.xpose.msra.mxu0 0.0
    %433 = vmatpush.xpose.msra.mxu0 0.0
    %434 = vmatpush.xpose.msra.mxu0 0.0
    %435 = vmatpush.xpose.msra.mxu0 0.0
    %436 = vmatpush.xpose.msra.mxu0 %v419
    %437 = vmatmul.f32.gmra.mxu0 %v417
    %v438 = vpop.f32.mrf.mxu0
    %v439 = vadd.f32 %v413, %v438
    %440 = vdwg.mxu0
    %v441 = vsel %vm264, %v439, -inf
    %442 = vmax.xlane.f32.xlu0 %v441
    %v443 = vpop.xlane.xlu0 %442
    %v444 = vsub.f32 %v439, %v443
    %v445 = vmul.f32 %v444, 1.442695
    %v446 = vpow.pop %v445
    %v447 = vsel %vm264, %v446, 0.0
    %448 = vadd.xlane.f32.xlu0 %v447
    %v449 = vpop.xlane.xlu0 %448
    %v450 = vrcp.pop %v449
    %v451 = vmul.f32 %v446, %v450
    %452 = vrot.lane.b32.xlu0 %v229, 64
    %v453 = vpop.permute.xlu0 %452
    %v456 = vsel %vm264, %v451, 0
    %458 = vmatpush.msra.mxu0 0.0
    %459 = vmatpush.msra.mxu0 0.0
    %460 = vmatpush.msra.mxu0 0.0
    %461 = vmatpush.msra.mxu0 0.0
    %462 = vmatpush.msra.mxu0 0.0
    %463 = vmatpush.msra.mxu0 0.0
    %464 = vmatpush.msra.mxu0 0.0
    %465 = vmatpush.msra.mxu0 0.0
    %466 = vmatpush.msra.mxu0 0.0
    %467 = vmatpush.msra.mxu0 0.0
    %468 = vmatpush.msra.mxu0 0.0
    %469 = vmatpush.msra.mxu0 0.0
    %470 = vmatpush.msra.mxu0 0.0
    %471 = vmatpush.msra.mxu0 0.0
    %472 = vmatpush.msra.mxu0 0.0
    %473 = vmatpush.msra.mxu0 %v453
    %474 = vmatmul.f32.gmra.mxu0 %v456
    %v475 = vpop.f32.mrf.mxu0
    %v476 = vadd.f32 0.0, %v475
    %477 = vdwg.mxu0
    %478 = vrot.lane.b32.xlu0 %v229, 112
    %v479 = vpop.permute.xlu0 %478
    %480 = vrot.lane.b32.xlu0 %v229, 80
    %v481 = vpop.permute.xlu0 %480
    %v482 = vsel %vm239, %v479, 0
    %v484 = vsel %vm239, %v481, 0
    %486 = vmatpush.xpose.msra.mxu0 0.0
    %487 = vmatpush.xpose.msra.mxu0 0.0
    %488 = vmatpush.xpose.msra.mxu0 0.0
    %489 = vmatpush.xpose.msra.mxu0 0.0
    %490 = vmatpush.xpose.msra.mxu0 0.0
    %491 = vmatpush.xpose.msra.mxu0 0.0
    %492 = vmatpush.xpose.msra.mxu0 0.0
    %493 = vmatpush.xpose.msra.mxu0 0.0
    %494 = vmatpush.xpose.msra.mxu0 0.0
    %495 = vmatpush.xpose.msra.mxu0 0.0
    %496 = vmatpush.xpose.msra.mxu0 0.0
    %497 = vmatpush.xpose.msra.mxu0 0.0
    %498 = vmatpush.xpose.msra.mxu0 0.0
    %499 = vmatpush.xpose.msra.mxu0 0.0
    %500 = vmatpush.xpose.msra.mxu0 0.0
    %501 = vmatpush.xpose.msra.mxu0 %v484
    %502 = vmatmul.f32.gmra.mxu0 %v482
    %v503 = vpop.f32.mrf.mxu0
    %v504 = vadd.f32 %v413, %v503
    %505 = vdwg.mxu0
    %v506 = vsel %vm264, %v504, -inf
    %507 = vmax.xlane.f32.xlu0 %v506
    %v508 = vpop.xlane.xlu0 %507
    %v509 = vsub.f32 %v504, %v508
    %v510 = vmul.f32 %v509, 1.442695
    %v511 = vpow.pop %v510
    %v512 = vsel %vm264, %v511, 0.0
    %513 = vadd.xlane.f32.xlu0 %v512
    %v514 = vpop.xlane.xlu0 %513
    %v515 = vrcp.pop %v514
    %v516 = vmul.f32 %v511, %v515
    %517 = vrot.lane.b32.xlu0 %v229, 48
    %v518 = vpop.permute.xlu0 %517
    %v521 = vsel %vm264, %v516, 0
    %523 = vmatpush.msra.mxu0 0.0
    %524 = vmatpush.msra.mxu0 0.0
    %525 = vmatpush.msra.mxu0 0.0
    %526 = vmatpush.msra.mxu0 0.0
    %527 = vmatpush.msra.mxu0 0.0
    %528 = vmatpush.msra.mxu0 0.0
    %529 = vmatpush.msra.mxu0 0.0
    %530 = vmatpush.msra.mxu0 0.0
    %531 = vmatpush.msra.mxu0 0.0
    %532 = vmatpush.msra.mxu0 0.0
    %533 = vmatpush.msra.mxu0 0.0
    %534 = vmatpush.msra.mxu0 0.0
    %535 = vmatpush.msra.mxu0 0.0
    %536 = vmatpush.msra.mxu0 0.0
    %537 = vmatpush.msra.mxu0 0.0
    %538 = vmatpush.msra.mxu0 %v518
    %539 = vmatmul.f32.gmra.mxu0 %v521
    %v540 = vpop.f32.mrf.mxu0
    %v541 = vadd.f32 0.0, %v540
    %542 = vdwg.mxu0
    %v544 = vsel %vm239, %v541, 0
    %546 = vmatpush.msra.mxu0 0.0
    %547 = vmatpush.msra.mxu0 0.0
    %548 = vmatpush.msra.mxu0 0.0
    %549 = vmatpush.msra.mxu0 0.0
    %550 = vmatpush.msra.mxu0 0.0
    %551 = vmatpush.msra.mxu0 0.0
    %552 = vmatpush.msra.mxu0 0.0
    %553 = vmatpush.msra.mxu0 0.0
    %554 = vmatpush.msra.mxu0 0.0
    %555 = vmatpush.msra.mxu0 0.0
    %556 = vmatpush.msra.mxu0 0.0
    %557 = vmatpush.msra.mxu0 0.0
    %558 = vmatpush.msra.mxu0 0.0
    %559 = vmatpush.msra.mxu0 0.0
    %560 = vmatpush.msra.mxu0 %v234
    %561 = vmatpush.msra.mxu0 %v233
    %562 = vmatmul.f32.gmra.mxu0 %v544
    %v563 = vpop.f32.mrf.mxu0
    %v564 = vadd.f32 0.0, %v563
    %565 = vdwg.mxu0
    %v567 = vsel %vm239, %v476, 0
    %569 = vmatpush.msra.mxu0 0.0
    %570 = vmatpush.msra.mxu0 0.0
    %571 = vmatpush.msra.mxu0 0.0
    %572 = vmatpush.msra.mxu0 0.0
    %573 = vmatpush.msra.mxu0 0.0
    %574 = vmatpush.msra.mxu0 0.0
    %575 = vmatpush.msra.mxu0 0.0
    %576 = vmatpush.msra.mxu0 0.0
    %577 = vmatpush.msra.mxu0 0.0
    %578 = vmatpush.msra.mxu0 0.0
    %579 = vmatpush.msra.mxu0 0.0
    %580 = vmatpush.msra.mxu0 0.0
    %581 = vmatpush.msra.mxu0 0.0
    %582 = vmatpush.msra.mxu0 0.0
    %583 = vmatpush.msra.mxu0 %v232
    %584 = vmatpush.msra.mxu0 %v231
    %585 = vmatmul.f32.gmra.mxu0 %v567
    %v586 = vpop.f32.mrf.mxu0
    %v587 = vadd.f32 %v564, %v586
    %588 = vdwg.mxu0
    %v589 = vld [vmem:[%s15] sm:$0x1]
    %v591 = vperm.slane %v589, 0
    %v593 = vadd.f32 %v411, %v591
    %v594 = vadd.f32 %v587, %v591
    %v595 = vadd.f32 %v192, %v593
    %v596 = vadd.f32 %v193, %v594
    %v597 = vsel %vm130, %v595, 0.0
    %598 = vadd.xlane.f32.xlu0 %v597
    %v599 = vpop.xlane.xlu0 %598
    %v600 = vsel %vm130, %v596, 0.0
    %601 = vadd.xlane.f32.xlu0 %v600
    %v602 = vpop.xlane.xlu0 %601
    %v603 = vmul.f32 %v599, %v143
    %v604 = vmul.f32 %v602, %v143
    %v605 = vsub.f32 %v595, %v603
    %v606 = vsub.f32 %v596, %v604
    %v607 = vmul.f32 %v605, %v605
    %v608 = vmul.f32 %v606, %v606
    %v609 = vsel %vm130, %v607, 0.0
    %610 = vadd.xlane.f32.xlu0 %v609
    %v611 = vpop.xlane.xlu0 %610
    %v612 = vsel %vm130, %v608, 0.0
    %613 = vadd.xlane.f32.xlu0 %v612
    %v614 = vpop.xlane.xlu0 %613
    %v615 = vmul.f32 %v611, %v143
    %v616 = vmul.f32 %v614, %v143
    %v617 = vadd.f32 %v615, 1e-12
    %v618 = vadd.f32 %v616, 1e-12
    %v619 = vrsqrt.pop %v617
    %v620 = vmul.f32 %v619, %v617
    %v621 = vmul.f32 %v620, %v619
    %v622 = vmul.f32 0.5, %v621
    %v623 = vsub.f32 1.5, %v622
    %v624 = vmul.f32 %v619, %v623
    %vm625 = vweird.f32 %v617
    %vm626 = vweird.f32 %v619
    %vm627 = vmor %vm625, %vm626
    %v628 = vsel %vm627, %v619, %v624
    %v629 = vrsqrt.pop %v618
    %v630 = vmul.f32 %v629, %v618
    %v631 = vmul.f32 %v630, %v629
    %v632 = vmul.f32 0.5, %v631
    %v633 = vsub.f32 1.5, %v632
    %v634 = vmul.f32 %v629, %v633
    %vm635 = vweird.f32 %v618
    %vm636 = vweird.f32 %v629
    %vm637 = vmor %vm635, %vm636
    %v638 = vsel %vm637, %v629, %v634
    %v639 = vmul.f32 %v605, %v628
    %v640 = vmul.f32 %v606, %v638
    %v641 = vld [vmem:[%s17] sm:$0x1]
    %v643 = vperm.slane %v641, 0
    %v645 = vmul.f32 %v639, %v643
    %v646 = vmul.f32 %v640, %v643
    %v647 = vld [vmem:[%s19] sm:$0x1]
    %v649 = vperm.slane %v647, 0
    %v651 = vadd.f32 %v645, %v649
    %v652 = vadd.f32 %v646, %v649
    %v653 = vld [vmem:[%s21] sm:$0xff]
    %v654 = vld [vmem:[%s21 + $0x8] sm:$0xff]
    %v655 = vld [vmem:[%s21 + $0x10] sm:$0xff]
    %v656 = vld [vmem:[%s21 + $0x18] sm:$0xff]
    %v657 = vld [vmem:[%s23] sm:$0x1]
    %v659 = vperm.slane %v657, 0
    %v662 = vsel %vm130, %v651, 0
    %v665 = vsel %vm130, %v652, 0
    %667 = vmatpush.msra.mxu0 0.0
    %668 = vmatpush.msra.mxu0 0.0
    %669 = vmatpush.msra.mxu0 0.0
    %670 = vmatpush.msra.mxu0 0.0
    %671 = vmatpush.msra.mxu0 0.0
    %672 = vmatpush.msra.mxu0 0.0
    %673 = vmatpush.msra.mxu0 0.0
    %674 = vmatpush.msra.mxu0 0.0
    %675 = vmatpush.msra.mxu0 0.0
    %676 = vmatpush.msra.mxu0 0.0
    %677 = vmatpush.msra.mxu0 0.0
    %678 = vmatpush.msra.mxu0 0.0
    %679 = vmatpush.msra.mxu0 %v656
    %680 = vmatpush.msra.mxu0 %v655
    %681 = vmatpush.msra.mxu0 %v654
    %682 = vmatpush.msra.mxu0 %v653
    %683 = vmatmul.f32.gmra.mxu0 %v662
    %v684 = vpop.f32.mrf.mxu0
    %v685 = vadd.f32 %v659, %v684
    %686 = vmatmul.f32.gmra.mxu0 %v665
    %v687 = vpop.f32.mrf.mxu0
    %v688 = vadd.f32 %v659, %v687
    %689 = vdwg.mxu0
    %v690 = vmul.f32 %v685, %v685
    %v691 = vmul.f32 %v688, %v688
    %v692 = vmul.f32 %v685, %v690
    %v693 = vmul.f32 %v688, %v691
    %v694 = vmul.f32 %v692, 0.044715
    %v695 = vmul.f32 %v693, 0.044715
    %v696 = vadd.f32 %v685, %v694
    %v697 = vadd.f32 %v688, %v695
    %v698 = vmul.f32 %v696, 0.7978846
    %v699 = vmul.f32 %v697, 0.7978846
    %v700 = vtanh.pop %v698
    %v701 = vtanh.pop %v699
    %v702 = vadd.f32 %v700, 1.0
    %v703 = vadd.f32 %v701, 1.0
    %v704 = vmul.f32 %v702, 0.5
    %v705 = vmul.f32 %v703, 0.5
    %v706 = vmul.f32 %v685, %v704
    %v707 = vmul.f32 %v688, %v705
    %v708 = vld [vmem:[%s25] sm:$0xff]
    %v709 = vld [vmem:[%s25 + $0x8] sm:$0xff]
    %v710 = vld [vmem:[%s25 + $0x10] sm:$0xff]
    %v711 = vld [vmem:[%s25 + $0x18] sm:$0xff]
    %v712 = vld [vmem:[%s25 + $0x20] sm:$0xff]
    %v713 = vld [vmem:[%s25 + $0x28] sm:$0xff]
    %v714 = vld [vmem:[%s25 + $0x30] sm:$0xff]
    %v715 = vld [vmem:[%s25 + $0x38] sm:$0xff]
    %v716 = vld [vmem:[%s27] sm:$0x1]
    %v718 = vperm.slane %v716, 0
    %vm720 = vcmask 523264
    %v722 = vsel %vm720, %v706, 0
    %v725 = vsel %vm720, %v707, 0
    %727 = vmatpush.msra.mxu0 0.0
    %728 = vmatpush.msra.mxu0 0.0
    %729 = vmatpush.msra.mxu0 0.0
    %730 = vmatpush.msra.mxu0 0.0
    %731 = vmatpush.msra.mxu0 0.0
    %732 = vmatpush.msra.mxu0 0.0
    %733 = vmatpush.msra.mxu0 0.0
    %734 = vmatpush.msra.mxu0 0.0
    %735 = vmatpush.msra.mxu0 %v715
    %736 = vmatpush.msra.mxu0 %v714
    %737 = vmatpush.msra.mxu0 %v713
    %738 = vmatpush.msra.mxu0 %v712
    %739 = vmatpush.msra.mxu0 %v711
    %740 = vmatpush.msra.mxu0 %v710
    %741 = vmatpush.msra.mxu0 %v709
    %742 = vmatpush.msra.mxu0 %v708
    %743 = vmatmul.f32.gmra.mxu0 %v722
    %v744 = vpop.f32.mrf.mxu0
    %v745 = vadd.f32 %v718, %v744
    %746 = vmatmul.f32.gmra.mxu0 %v725
    %v747 = vpop.f32.mrf.mxu0
    %v748 = vadd.f32 %v718, %v747
    %749 = vdwg.mxu0
    %v750 = vadd.f32 %v651, %v745
    %v751 = vadd.f32 %v652, %v748
    %v752 = vsel %vm130, %v750, 0.0
    %753 = vadd.xlane.f32.xlu0 %v752
    %v754 = vpop.xlane.xlu0 %753
    %v755 = vsel %vm130, %v751, 0.0
    %756 = vadd.xlane.f32.xlu0 %v755
    %v757 = vpop.xlane.xlu0 %756
    %v758 = vmul.f32 %v754, %v143
    %v759 = vmul.f32 %v757, %v143
    %v760 = vsub.f32 %v750, %v758
    %v761 = vsub.f32 %v751, %v759
    %v762 = vmul.f32 %v760, %v760
    %v763 = vmul.f32 %v761, %v761
    %v764 = vsel %vm130, %v762, 0.0
    %765 = vadd.xlane.f32.xlu0 %v764
    %v766 = vpop.xlane.xlu0 %765
    %v767 = vsel %vm130, %v763, 0.0
    %768 = vadd.xlane.f32.xlu0 %v767
    %v769 = vpop.xlane.xlu0 %768
    %v770 = vmul.f32 %v766, %v143
    %v771 = vmul.f32 %v769, %v143
    %v772 = vadd.f32 %v770, 1e-12
    %v773 = vadd.f32 %v771, 1e-12
    %v774 = vrsqrt.pop %v772
    %v775 = vmul.f32 %v774, %v772
    %v776 = vmul.f32 %v775, %v774
    %v777 = vmul.f32 0.5, %v776
    %v778 = vsub.f32 1.5, %v777
    %v779 = vmul.f32 %v774, %v778
    %vm780 = vweird.f32 %v772
    %vm781 = vweird.f32 %v774
    %vm782 = vmor %vm780, %vm781
    %v783 = vsel %vm782, %v774, %v779
    %v784 = vrsqrt.pop %v773
    %v785 = vmul.f32 %v784, %v773
    %v786 = vmul.f32 %v785, %v784
    %v787 = vmul.f32 0.5, %v786
    %v788 = vsub.f32 1.5, %v787
    %v789 = vmul.f32 %v784, %v788
    %vm790 = vweird.f32 %v773
    %vm791 = vweird.f32 %v784
    %vm792 = vmor %vm790, %vm791
    %v793 = vsel %vm792, %v784, %v789
    %v794 = vmul.f32 %v760, %v783
    %v795 = vmul.f32 %v761, %v793
    %v796 = vld [vmem:[%s29] sm:$0x1]
    %v798 = vperm.slane %v796, 0
    %v800 = vmul.f32 %v794, %v798
    %v801 = vmul.f32 %v795, %v798
    %v802 = vld [vmem:[%s31] sm:$0x1]
    %v804 = vperm.slane %v802, 0
    %v806 = vadd.f32 %v800, %v804
    %v807 = vadd.f32 %v801, %v804
    %v808 = vld [vmem:[%s33] sm:$0xff]
    %v809 = vld [vmem:[%s33 + $0x8] sm:$0xff]
    %v810 = vld [vmem:[%s33 + $0x10] sm:$0xff]
    %v811 = vld [vmem:[%s33 + $0x18] sm:$0xff]
    %v812 = vld [vmem:[%s35] sm:$0x1]
    %v814 = vperm.slane %v812, 0
    %v817 = vsel %vm130, %v806, 0
    %v820 = vsel %vm130, %v807, 0
    %822 = vmatpush.msra.mxu0 0.0
    %823 = vmatpush.msra.mxu0 0.0
    %824 = vmatpush.msra.mxu0 0.0
    %825 = vmatpush.msra.mxu0 0.0
    %826 = vmatpush.msra.mxu0 0.0
    %827 = vmatpush.msra.mxu0 0.0
    %828 = vmatpush.msra.mxu0 0.0
    %829 = vmatpush.msra.mxu0 0.0
    %830 = vmatpush.msra.mxu0 0.0
    %831 = vmatpush.msra.mxu0 0.0
    %832 = vmatpush.msra.mxu0 0.0
    %833 = vmatpush.msra.mxu0 0.0
    %834 = vmatpush.msra.mxu0 %v811
    %835 = vmatpush.msra.mxu0 %v810
    %836 = vmatpush.msra.mxu0 %v809
    %837 = vmatpush.msra.mxu0 %v808
    %838 = vmatmul.f32.gmra.mxu0 %v817
    %v839 = vpop.f32.mrf.mxu0
    %v840 = vadd.f32 %v814, %v839
    %841 = vmatmul.f32.gmra.mxu0 %v820
    %v842 = vpop.f32.mrf.mxu0
    %v843 = vadd.f32 %v814, %v842
    %844 = vdwg.mxu0
    %v845 = vld [vmem:[%s37] sm:$0xff]
    %v846 = vld [vmem:[%s37 + $0x8] sm:$0xff]
    %v847 = vld [vmem:[%s37 + $0x10] sm:$0xff]
    %v848 = vld [vmem:[%s37 + $0x18] sm:$0xff]
    %850 = vrot.lane.b32.xlu0 %v840, 96
    %v851 = vpop.permute.xlu0 %850
    %v852 = vsel %vm239, %v840, 0
    %v854 = vsel %vm239, %v851, 0
    %856 = vmatpush.xpose.msra.mxu0 0.0
    %857 = vmatpush.xpose.msra.mxu0 0.0
    %858 = vmatpush.xpose.msra.mxu0 0.0
    %859 = vmatpush.xpose.msra.mxu0 0.0
    %860 = vmatpush.xpose.msra.mxu0 0.0
    %861 = vmatpush.xpose.msra.mxu0 0.0
    %862 = vmatpush.xpose.msra.mxu0 0.0
    %863 = vmatpush.xpose.msra.mxu0 0.0
    %864 = vmatpush.xpose.msra.mxu0 0.0
    %865 = vmatpush.xpose.msra.mxu0 0.0
    %866 = vmatpush.xpose.msra.mxu0 0.0
    %867 = vmatpush.xpose.msra.mxu0 0.0
    %868 = vmatpush.xpose.msra.mxu0 0.0
    %869 = vmatpush.xpose.msra.mxu0 0.0
    %870 = vmatpush.xpose.msra.mxu0 0.0
    %871 = vmatpush.xpose.msra.mxu0 %v854
    %872 = vmatmul.f32.gmra.mxu0 %v852
    %v873 = vpop.f32.mrf.mxu0
    %v874 = vadd.f32 %v235, %v873
    %875 = vdwg.mxu0
    %v876 = vsel %vm264, %v874, -inf
    %877 = vmax.xlane.f32.xlu0 %v876
    %v878 = vpop.xlane.xlu0 %877
    %v879 = vsub.f32 %v874, %v878
    %v880 = vmul.f32 %v879, 1.442695
    %v881 = vpow.pop %v880
    %v882 = vsel %vm264, %v881, 0.0
    %883 = vadd.xlane.f32.xlu0 %v882
    %v884 = vpop.xlane.xlu0 %883
    %v885 = vrcp.pop %v884
    %v886 = vmul.f32 %v881, %v885
    %887 = vrot.lane.b32.xlu0 %v840, 64
    %v888 = vpop.permute.xlu0 %887
    %v891 = vsel %vm264, %v886, 0
    %893 = vmatpush.msra.mxu0 0.0
    %894 = vmatpush.msra.mxu0 0.0
    %895 = vmatpush.msra.mxu0 0.0
    %896 = vmatpush.msra.mxu0 0.0
    %897 = vmatpush.msra.mxu0 0.0
    %898 = vmatpush.msra.mxu0 0.0
    %899 = vmatpush.msra.mxu0 0.0
    %900 = vmatpush.msra.mxu0 0.0
    %901 = vmatpush.msra.mxu0 0.0
    %902 = vmatpush.msra.mxu0 0.0
    %903 = vmatpush.msra.mxu0 0.0
    %904 = vmatpush.msra.mxu0 0.0
    %905 = vmatpush.msra.mxu0 0.0
    %906 = vmatpush.msra.mxu0 0.0
    %907 = vmatpush.msra.mxu0 0.0
    %908 = vmatpush.msra.mxu0 %v888
    %909 = vmatmul.f32.gmra.mxu0 %v891
    %v910 = vpop.f32.mrf.mxu0
    %v911 = vadd.f32 0.0, %v910
    %912 = vdwg.mxu0
    %913 = vrot.lane.b32.xlu0 %v840, 112
    %v914 = vpop.permute.xlu0 %913
    %915 = vrot.lane.b32.xlu0 %v840, 80
    %v916 = vpop.permute.xlu0 %915
    %v917 = vsel %vm239, %v914, 0
    %v919 = vsel %vm239, %v916, 0
    %921 = vmatpush.xpose.msra.mxu0 0.0
    %922 = vmatpush.xpose.msra.mxu0 0.0
    %923 = vmatpush.xpose.msra.mxu0 0.0
    %924 = vmatpush.xpose.msra.mxu0 0.0
    %925 = vmatpush.xpose.msra.mxu0 0.0
    %926 = vmatpush.xpose.msra.mxu0 0.0
    %927 = vmatpush.xpose.msra.mxu0 0.0
    %928 = vmatpush.xpose.msra.mxu0 0.0
    %929 = vmatpush.xpose.msra.mxu0 0.0
    %930 = vmatpush.xpose.msra.mxu0 0.0
    %931 = vmatpush.xpose.msra.mxu0 0.0
    %932 = vmatpush.xpose.msra.mxu0 0.0
    %933 = vmatpush.xpose.msra.mxu0 0.0
    %934 = vmatpush.xpose.msra.mxu0 0.0
    %935 = vmatpush.xpose.msra.mxu0 0.0
    %936 = vmatpush.xpose.msra.mxu0 %v919
    %937 = vmatmul.f32.gmra.mxu0 %v917
    %v938 = vpop.f32.mrf.mxu0
    %v939 = vadd.f32 %v235, %v938
    %940 = vdwg.mxu0
    %v941 = vsel %vm264, %v939, -inf
    %942 = vmax.xlane.f32.xlu0 %v941
    %v943 = vpop.xlane.xlu0 %942
    %v944 = vsub.f32 %v939, %v943
    %v945 = vmul.f32 %v944, 1.442695
    %v946 = vpow.pop %v945
    %v947 = vsel %vm264, %v946, 0.0
    %948 = vadd.xlane.f32.xlu0 %v947
    %v949 = vpop.xlane.xlu0 %948
    %v950 = vrcp.pop %v949
    %v951 = vmul.f32 %v946, %v950
    %952 = vrot.lane.b32.xlu0 %v840, 48
    %v953 = vpop.permute.xlu0 %952
    %v956 = vsel %vm264, %v951, 0
    %958 = vmatpush.msra.mxu0 0.0
    %959 = vmatpush.msra.mxu0 0.0
    %960 = vmatpush.msra.mxu0 0.0
    %961 = vmatpush.msra.mxu0 0.0
    %962 = vmatpush.msra.mxu0 0.0
    %963 = vmatpush.msra.mxu0 0.0
    %964 = vmatpush.msra.mxu0 0.0
    %965 = vmatpush.msra.mxu0 0.0
    %966 = vmatpush.msra.mxu0 0.0
    %967 = vmatpush.msra.mxu0 0.0
    %968 = vmatpush.msra.mxu0 0.0
    %969 = vmatpush.msra.mxu0 0.0
    %970 = vmatpush.msra.mxu0 0.0
    %971 = vmatpush.msra.mxu0 0.0
    %972 = vmatpush.msra.mxu0 0.0
    %973 = vmatpush.msra.mxu0 %v953
    %974 = vmatmul.f32.gmra.mxu0 %v956
    %v975 = vpop.f32.mrf.mxu0
    %v976 = vadd.f32 0.0, %v975
    %977 = vdwg.mxu0
    %v979 = vsel %vm239, %v976, 0
    %981 = vmatpush.msra.mxu0 0.0
    %982 = vmatpush.msra.mxu0 0.0
    %983 = vmatpush.msra.mxu0 0.0
    %984 = vmatpush.msra.mxu0 0.0
    %985 = vmatpush.msra.mxu0 0.0
    %986 = vmatpush.msra.mxu0 0.0
    %987 = vmatpush.msra.mxu0 0.0
    %988 = vmatpush.msra.mxu0 0.0
    %989 = vmatpush.msra.mxu0 0.0
    %990 = vmatpush.msra.mxu0 0.0
    %991 = vmatpush.msra.mxu0 0.0
    %992 = vmatpush.msra.mxu0 0.0
    %993 = vmatpush.msra.mxu0 0.0
    %994 = vmatpush.msra.mxu0 0.0
    %995 = vmatpush.msra.mxu0 %v848
    %996 = vmatpush.msra.mxu0 %v847
    %997 = vmatmul.f32.gmra.mxu0 %v979
    %v998 = vpop.f32.mrf.mxu0
    %v999 = vadd.f32 0.0, %v998
    %1000 = vdwg.mxu0
    %v1002 = vsel %vm239, %v911, 0
    %1004 = vmatpush.msra.mxu0 0.0
    %1005 = vmatpush.msra.mxu0 0.0
    %1006 = vmatpush.msra.mxu0 0.0
    %1007 = vmatpush.msra.mxu0 0.0
    %1008 = vmatpush.msra.mxu0 0.0
    %1009 = vmatpush.msra.mxu0 0.0
    %1010 = vmatpush.msra.mxu0 0.0
    %1011 = vmatpush.msra.mxu0 0.0
    %1012 = vmatpush.msra.mxu0 0.0
    %1013 = vmatpush.msra.mxu0 0.0
    %1014 = vmatpush.msra.mxu0 0.0
    %1015 = vmatpush.msra.mxu0 0.0
    %1016 = vmatpush.msra.mxu0 0.0
    %1017 = vmatpush.msra.mxu0 0.0
    %1018 = vmatpush.msra.mxu0 %v846
    %1019 = vmatpush.msra.mxu0 %v845
    %1020 = vmatmul.f32.gmra.mxu0 %v1002
    %v1021 = vpop.f32.mrf.mxu0
    %v1022 = vadd.f32 %v999, %v1021
    %1023 = vdwg.mxu0
    %1025 = vrot.lane.b32.xlu0 %v843, 96
    %v1026 = vpop.permute.xlu0 %1025
    %v1027 = vsel %vm239, %v843, 0
    %v1029 = vsel %vm239, %v1026, 0
    %1031 = vmatpush.xpose.msra.mxu0 0.0
    %1032 = vmatpush.xpose.msra.mxu0 0.0
    %1033 = vmatpush.xpose.msra.mxu0 0.0
    %1034 = vmatpush.xpose.msra.mxu0 0.0
    %1035 = vmatpush.xpose.msra.mxu0 0.0
    %1036 = vmatpush.xpose.msra.mxu0 0.0
    %1037 = vmatpush.xpose.msra.mxu0 0.0
    %1038 = vmatpush.xpose.msra.mxu0 0.0
    %1039 = vmatpush.xpose.msra.mxu0 0.0
    %1040 = vmatpush.xpose.msra.mxu0 0.0
    %1041 = vmatpush.xpose.msra.mxu0 0.0
    %1042 = vmatpush.xpose.msra.mxu0 0.0
    %1043 = vmatpush.xpose.msra.mxu0 0.0
    %1044 = vmatpush.xpose.msra.mxu0 0.0
    %1045 = vmatpush.xpose.msra.mxu0 0.0
    %1046 = vmatpush.xpose.msra.mxu0 %v1029
    %1047 = vmatmul.f32.gmra.mxu0 %v1027
    %v1048 = vpop.f32.mrf.mxu0
    %v1049 = vadd.f32 %v413, %v1048
    %1050 = vdwg.mxu0
    %v1051 = vsel %vm264, %v1049, -inf
    %1052 = vmax.xlane.f32.xlu0 %v1051
    %v1053 = vpop.xlane.xlu0 %1052
    %v1054 = vsub.f32 %v1049, %v1053
    %v1055 = vmul.f32 %v1054, 1.442695
    %v1056 = vpow.pop %v1055
    %v1057 = vsel %vm264, %v1056, 0.0
    %1058 = vadd.xlane.f32.xlu0 %v1057
    %v1059 = vpop.xlane.xlu0 %1058
    %v1060 = vrcp.pop %v1059
    %v1061 = vmul.f32 %v1056, %v1060
    %1062 = vrot.lane.b32.xlu0 %v843, 64
    %v1063 = vpop.permute.xlu0 %1062
    %v1066 = vsel %vm264, %v1061, 0
    %1068 = vmatpush.msra.mxu0 0.0
    %1069 = vmatpush.msra.mxu0 0.0
    %1070 = vmatpush.msra.mxu0 0.0
    %1071 = vmatpush.msra.mxu0 0.0
    %1072 = vmatpush.msra.mxu0 0.0
    %1073 = vmatpush.msra.mxu0 0.0
    %1074 = vmatpush.msra.mxu0 0.0
    %1075 = vmatpush.msra.mxu0 0.0
    %1076 = vmatpush.msra.mxu0 0.0
    %1077 = vmatpush.msra.mxu0 0.0
    %1078 = vmatpush.msra.mxu0 0.0
    %1079 = vmatpush.msra.mxu0 0.0
    %1080 = vmatpush.msra.mxu0 0.0
    %1081 = vmatpush.msra.mxu0 0.0
    %1082 = vmatpush.msra.mxu0 0.0
    %1083 = vmatpush.msra.mxu0 %v1063
    %1084 = vmatmul.f32.gmra.mxu0 %v1066
    %v1085 = vpop.f32.mrf.mxu0
    %v1086 = vadd.f32 0.0, %v1085
    %1087 = vdwg.mxu0
    %1088 = vrot.lane.b32.xlu0 %v843, 112
    %v1089 = vpop.permute.xlu0 %1088
    %1090 = vrot.lane.b32.xlu0 %v843, 80
    %v1091 = vpop.permute.xlu0 %1090
    %v1092 = vsel %vm239, %v1089, 0
    %v1094 = vsel %vm239, %v1091, 0
    %1096 = vmatpush.xpose.msra.mxu0 0.0
    %1097 = vmatpush.xpose.msra.mxu0 0.0
    %1098 = vmatpush.xpose.msra.mxu0 0.0
    %1099 = vmatpush.xpose.msra.mxu0 0.0
    %1100 = vmatpush.xpose.msra.mxu0 0.0
    %1101 = vmatpush.xpose.msra.mxu0 0.0
    %1102 = vmatpush.xpose.msra.mxu0 0.0
    %1103 = vmatpush.xpose.msra.mxu0 0.0
    %1104 = vmatpush.xpose.msra.mxu0 0.0
    %1105 = vmatpush.xpose.msra.mxu0 0.0
    %1106 = vmatpush.xpose.msra.mxu0 0.0
    %1107 = vmatpush.xpose.msra.mxu0 0.0
    %1108 = vmatpush.xpose.msra.mxu0 0.0
    %1109 = vmatpush.xpose.msra.mxu0 0.0
    %1110 = vmatpush.xpose.msra.mxu0 0.0
    %1111 = vmatpush.xpose.msra.mxu0 %v1094
    %1112 = vmatmul.f32.gmra.mxu0 %v1092
    %v1113 = vpop.f32.mrf.mxu0
    %v1114 = vadd.f32 %v413, %v1113
    %1115 = vdwg.mxu0
    %v1116 = vsel %vm264, %v1114, -inf
    %1117 = vmax.xlane.f32.xlu0 %v1116
    %v1118 = vpop.xlane.xlu0 %1117
    %v1119 = vsub.f32 %v1114, %v1118
    %v1120 = vmul.f32 %v1119, 1.442695
    %v1121 = vpow.pop %v1120
    %v1122 = vsel %vm264, %v1121, 0.0
    %1123 = vadd.xlane.f32.xlu0 %v1122
    %v1124 = vpop.xlane.xlu0 %1123
    %v1125 = vrcp.pop %v1124
    %v1126 = vmul.f32 %v1121, %v1125
    %1127 = vrot.lane.b32.xlu0 %v843, 48
    %v1128 = vpop.permute.xlu0 %1127
    %v1131 = vsel %vm264, %v1126, 0
    %1133 = vmatpush.msra.mxu0 0.0
    %1134 = vmatpush.msra.mxu0 0.0
    %1135 = vmatpush.msra.mxu0 0.0
    %1136 = vmatpush.msra.mxu0 0.0
    %1137 = vmatpush.msra.mxu0 0.0
    %1138 = vmatpush.msra.mxu0 0.0
    %1139 = vmatpush.msra.mxu0 0.0
    %1140 = vmatpush.msra.mxu0 0.0
    %1141 = vmatpush.msra.mxu0 0.0
    %1142 = vmatpush.msra.mxu0 0.0
    %1143 = vmatpush.msra.mxu0 0.0
    %1144 = vmatpush.msra.mxu0 0.0
    %1145 = vmatpush.msra.mxu0 0.0
    %1146 = vmatpush.msra.mxu0 0.0
    %1147 = vmatpush.msra.mxu0 0.0
    %1148 = vmatpush.msra.mxu0 %v1128
    %1149 = vmatmul.f32.gmra.mxu0 %v1131
    %v1150 = vpop.f32.mrf.mxu0
    %v1151 = vadd.f32 0.0, %v1150
    %1152 = vdwg.mxu0
    %v1154 = vsel %vm239, %v1151, 0
    %1156 = vmatpush.msra.mxu0 0.0
    %1157 = vmatpush.msra.mxu0 0.0
    %1158 = vmatpush.msra.mxu0 0.0
    %1159 = vmatpush.msra.mxu0 0.0
    %1160 = vmatpush.msra.mxu0 0.0
    %1161 = vmatpush.msra.mxu0 0.0
    %1162 = vmatpush.msra.mxu0 0.0
    %1163 = vmatpush.msra.mxu0 0.0
    %1164 = vmatpush.msra.mxu0 0.0
    %1165 = vmatpush.msra.mxu0 0.0
    %1166 = vmatpush.msra.mxu0 0.0
    %1167 = vmatpush.msra.mxu0 0.0
    %1168 = vmatpush.msra.mxu0 0.0
    %1169 = vmatpush.msra.mxu0 0.0
    %1170 = vmatpush.msra.mxu0 %v848
    %1171 = vmatpush.msra.mxu0 %v847
    %1172 = vmatmul.f32.gmra.mxu0 %v1154
    %v1173 = vpop.f32.mrf.mxu0
    %v1174 = vadd.f32 0.0, %v1173
    %1175 = vdwg.mxu0
    %v1177 = vsel %vm239, %v1086, 0
    %1179 = vmatpush.msra.mxu0 0.0
    %1180 = vmatpush.msra.mxu0 0.0
    %1181 = vmatpush.msra.mxu0 0.0
    %1182 = vmatpush.msra.mxu0 0.0
    %1183 = vmatpush.msra.mxu0 0.0
    %1184 = vmatpush.msra.mxu0 0.0
    %1185 = vmatpush.msra.mxu0 0.0
    %1186 = vmatpush.msra.mxu0 0.0
    %1187 = vmatpush.msra.mxu0 0.0
    %1188 = vmatpush.msra.mxu0 0.0
    %1189 = vmatpush.msra.mxu0 0.0
    %1190 = vmatpush.msra.mxu0 0.0
    %1191 = vmatpush.msra.mxu0 0.0
    %1192 = vmatpush.msra.mxu0 0.0
    %1193 = vmatpush.msra.mxu0 %v846
    %1194 = vmatpush.msra.mxu0 %v845
    %1195 = vmatmul.f32.gmra.mxu0 %v1177
    %v1196 = vpop.f32.mrf.mxu0
    %v1197 = vadd.f32 %v1174, %v1196
    %1198 = vdwg.mxu0
    %v1199 = vld [vmem:[%s39] sm:$0x1]
    %v1201 = vperm.slane %v1199, 0
    %v1203 = vadd.f32 %v1022, %v1201
    %v1204 = vadd.f32 %v1197, %v1201
    %v1205 = vadd.f32 %v806, %v1203
    %v1206 = vadd.f32 %v807, %v1204
    %v1207 = vsel %vm130, %v1205, 0.0
    %1208 = vadd.xlane.f32.xlu0 %v1207
    %v1209 = vpop.xlane.xlu0 %1208
    %v1210 = vsel %vm130, %v1206, 0.0
    %1211 = vadd.xlane.f32.xlu0 %v1210
    %v1212 = vpop.xlane.xlu0 %1211
    %v1213 = vmul.f32 %v1209, %v143
    %v1214 = vmul.f32 %v1212, %v143
    %v1215 = vsub.f32 %v1205, %v1213
    %v1216 = vsub.f32 %v1206, %v1214
    %v1217 = vmul.f32 %v1215, %v1215
    %v1218 = vmul.f32 %v1216, %v1216
    %v1219 = vsel %vm130, %v1217, 0.0
    %1220 = vadd.xlane.f32.xlu0 %v1219
    %v1221 = vpop.xlane.xlu0 %1220
    %v1222 = vsel %vm130, %v1218, 0.0
    %1223 = vadd.xlane.f32.xlu0 %v1222
    %v1224 = vpop.xlane.xlu0 %1223
    %v1225 = vmul.f32 %v1221, %v143
    %v1226 = vmul.f32 %v1224, %v143
    %v1227 = vadd.f32 %v1225, 1e-12
    %v1228 = vadd.f32 %v1226, 1e-12
    %v1229 = vrsqrt.pop %v1227
    %v1230 = vmul.f32 %v1229, %v1227
    %v1231 = vmul.f32 %v1230, %v1229
    %v1232 = vmul.f32 0.5, %v1231
    %v1233 = vsub.f32 1.5, %v1232
    %v1234 = vmul.f32 %v1229, %v1233
    %vm1235 = vweird.f32 %v1227
    %vm1236 = vweird.f32 %v1229
    %vm1237 = vmor %vm1235, %vm1236
    %v1238 = vsel %vm1237, %v1229, %v1234
    %v1239 = vrsqrt.pop %v1228
    %v1240 = vmul.f32 %v1239, %v1228
    %v1241 = vmul.f32 %v1240, %v1239
    %v1242 = vmul.f32 0.5, %v1241
    %v1243 = vsub.f32 1.5, %v1242
    %v1244 = vmul.f32 %v1239, %v1243
    %vm1245 = vweird.f32 %v1228
    %vm1246 = vweird.f32 %v1239
    %vm1247 = vmor %vm1245, %vm1246
    %v1248 = vsel %vm1247, %v1239, %v1244
    %v1249 = vmul.f32 %v1215, %v1238
    %v1250 = vmul.f32 %v1216, %v1248
    %v1251 = vld [vmem:[%s41] sm:$0x1]
    %v1253 = vperm.slane %v1251, 0
    %v1255 = vmul.f32 %v1249, %v1253
    %v1256 = vmul.f32 %v1250, %v1253
    %v1257 = vld [vmem:[%s43] sm:$0x1]
    %v1259 = vperm.slane %v1257, 0
    %v1261 = vadd.f32 %v1255, %v1259
    %v1262 = vadd.f32 %v1256, %v1259
    %v1263 = vld [vmem:[%s45] sm:$0xff]
    %v1264 = vld [vmem:[%s45 + $0x8] sm:$0xff]
    %v1265 = vld [vmem:[%s45 + $0x10] sm:$0xff]
    %v1266 = vld [vmem:[%s45 + $0x18] sm:$0xff]
    %v1267 = vld [vmem:[%s47] sm:$0x1]
    %v1269 = vperm.slane %v1267, 0
    %v1272 = vsel %vm130, %v1261, 0
    %v1275 = vsel %vm130, %v1262, 0
    %1277 = vmatpush.msra.mxu0 0.0
    %1278 = vmatpush.msra.mxu0 0.0
    %1279 = vmatpush.msra.mxu0 0.0
    %1280 = vmatpush.msra.mxu0 0.0
    %1281 = vmatpush.msra.mxu0 0.0
    %1282 = vmatpush.msra.mxu0 0.0
    %1283 = vmatpush.msra.mxu0 0.0
    %1284 = vmatpush.msra.mxu0 0.0
    %1285 = vmatpush.msra.mxu0 0.0
    %1286 = vmatpush.msra.mxu0 0.0
    %1287 = vmatpush.msra.mxu0 0.0
    %1288 = vmatpush.msra.mxu0 0.0
    %1289 = vmatpush.msra.mxu0 %v1266
    %1290 = vmatpush.msra.mxu0 %v1265
    %1291 = vmatpush.msra.mxu0 %v1264
    %1292 = vmatpush.msra.mxu0 %v1263
    %1293 = vmatmul.f32.gmra.mxu0 %v1272
    %v1294 = vpop.f32.mrf.mxu0
    %v1295 = vadd.f32 %v1269, %v1294
    %1296 = vmatmul.f32.gmra.mxu0 %v1275
    %v1297 = vpop.f32.mrf.mxu0
    %v1298 = vadd.f32 %v1269, %v1297
    %1299 = vdwg.mxu0
    %v1300 = vmul.f32 %v1295, %v1295
    %v1301 = vmul.f32 %v1298, %v1298
    %v1302 = vmul.f32 %v1295, %v1300
    %v1303 = vmul.f32 %v1298, %v1301
    %v1304 = vmul.f32 %v1302, 0.044715
    %v1305 = vmul.f32 %v1303, 0.044715
    %v1306 = vadd.f32 %v1295, %v1304
    %v1307 = vadd.f32 %v1298, %v1305
    %v1308 = vmul.f32 %v1306, 0.7978846
    %v1309 = vmul.f32 %v1307, 0.7978846
    %v1310 = vtanh.pop %v1308
    %v1311 = vtanh.pop %v1309
    %v1312 = vadd.f32 %v1310, 1.0
    %v1313 = vadd.f32 %v1311, 1.0
    %v1314 = vmul.f32 %v1312, 0.5
    %v1315 = vmul.f32 %v1313, 0.5
    %v1316 = vmul.f32 %v1295, %v1314
    %v1317 = vmul.f32 %v1298, %v1315
    %v1318 = vld [vmem:[%s49] sm:$0xff]
    %v1319 = vld [vmem:[%s49 + $0x8] sm:$0xff]
    %v1320 = vld [vmem:[%s49 + $0x10] sm:$0xff]
    %v1321 = vld [vmem:[%s49 + $0x18] sm:$0xff]
    %v1322 = vld [vmem:[%s49 + $0x20] sm:$0xff]
    %v1323 = vld [vmem:[%s49 + $0x28] sm:$0xff]
    %v1324 = vld [vmem:[%s49 + $0x30] sm:$0xff]
    %v1325 = vld [vmem:[%s49 + $0x38] sm:$0xff]
    %v1326 = vld [vmem:[%s51] sm:$0x1]
    %v1328 = vperm.slane %v1326, 0
    %v1331 = vsel %vm720, %v1316, 0
    %v1334 = vsel %vm720, %v1317, 0
    %1336 = vmatpush.msra.mxu0 0.0
    %1337 = vmatpush.msra.mxu0 0.0
    %1338 = vmatpush.msra.mxu0 0.0
    %1339 = vmatpush.msra.mxu0 0.0
    %1340 = vmatpush.msra.mxu0 0.0
    %1341 = vmatpush.msra.mxu0 0.0
    %1342 = vmatpush.msra.mxu0 0.0
    %1343 = vmatpush.msra.mxu0 0.0
    %1344 = vmatpush.msra.mxu0 %v1325
    %1345 = vmatpush.msra.mxu0 %v1324
    %1346 = vmatpush.msra.mxu0 %v1323
    %1347 = vmatpush.msra.mxu0 %v1322
    %1348 = vmatpush.msra.mxu0 %v1321
    %1349 = vmatpush.msra.mxu0 %v1320
    %1350 = vmatpush.msra.mxu0 %v1319
    %1351 = vmatpush.msra.mxu0 %v1318
    %1352 = vmatmul.f32.gmra.mxu0 %v1331
    %v1353 = vpop.f32.mrf.mxu0
    %v1354 = vadd.f32 %v1328, %v1353
    %1355 = vmatmul.f32.gmra.mxu0 %v1334
    %v1356 = vpop.f32.mrf.mxu0
    %v1357 = vadd.f32 %v1328, %v1356
    %1358 = vdwg.mxu0
    %v1359 = vadd.f32 %v1261, %v1354
    %v1360 = vadd.f32 %v1262, %v1357
    %v1361 = vsel %vm130, %v1359, 0.0
    %1362 = vadd.xlane.f32.xlu0 %v1361
    %v1363 = vpop.xlane.xlu0 %1362
    %v1364 = vsel %vm130, %v1360, 0.0
    %1365 = vadd.xlane.f32.xlu0 %v1364
    %v1366 = vpop.xlane.xlu0 %1365
    %v1367 = vmul.f32 %v1363, %v143
    %v1368 = vmul.f32 %v1366, %v143
    %v1369 = vsub.f32 %v1359, %v1367
    %v1370 = vsub.f32 %v1360, %v1368
    %v1371 = vmul.f32 %v1369, %v1369
    %v1372 = vmul.f32 %v1370, %v1370
    %v1373 = vsel %vm130, %v1371, 0.0
    %1374 = vadd.xlane.f32.xlu0 %v1373
    %v1375 = vpop.xlane.xlu0 %1374
    %v1376 = vsel %vm130, %v1372, 0.0
    %1377 = vadd.xlane.f32.xlu0 %v1376
    %v1378 = vpop.xlane.xlu0 %1377
    %v1379 = vmul.f32 %v1375, %v143
    %v1380 = vmul.f32 %v1378, %v143
    %v1381 = vadd.f32 %v1379, 1e-12
    %v1382 = vadd.f32 %v1380, 1e-12
    %v1383 = vrsqrt.pop %v1381
    %v1384 = vmul.f32 %v1383, %v1381
    %v1385 = vmul.f32 %v1384, %v1383
    %v1386 = vmul.f32 0.5, %v1385
    %v1387 = vsub.f32 1.5, %v1386
    %v1388 = vmul.f32 %v1383, %v1387
    %vm1389 = vweird.f32 %v1381
    %vm1390 = vweird.f32 %v1383
    %vm1391 = vmor %vm1389, %vm1390
    %v1392 = vsel %vm1391, %v1383, %v1388
    %v1393 = vrsqrt.pop %v1382
    %v1394 = vmul.f32 %v1393, %v1382
    %v1395 = vmul.f32 %v1394, %v1393
    %v1396 = vmul.f32 0.5, %v1395
    %v1397 = vsub.f32 1.5, %v1396
    %v1398 = vmul.f32 %v1393, %v1397
    %vm1399 = vweird.f32 %v1382
    %vm1400 = vweird.f32 %v1393
    %vm1401 = vmor %vm1399, %vm1400
    %v1402 = vsel %vm1401, %v1393, %v1398
    %v1403 = vmul.f32 %v1369, %v1392
    %v1404 = vmul.f32 %v1370, %v1402
    %v1405 = vld [vmem:[%s53] sm:$0x1]
    %v1407 = vperm.slane %v1405, 0
    %v1409 = vmul.f32 %v1403, %v1407
    %v1410 = vmul.f32 %v1404, %v1407
    %v1411 = vld [vmem:[%s55] sm:$0x1]
    %v1413 = vperm.slane %v1411, 0
    %v1415 = vadd.f32 %v1409, %v1413
    %v1416 = vadd.f32 %v1410, %v1413
    %v1417 = vld [vmem:[%s57] sm:$0xff]
    %v1418 = vld [vmem:[%s57 + $0x8] sm:$0xff]
    %v1419 = vld [vmem:[%s57 + $0x10] sm:$0xff]
    %v1420 = vld [vmem:[%s57 + $0x18] sm:$0xff]
    %v1421 = vld [vmem:[%s57 + $0x20] sm:$0xff]
    %v1422 = vld [vmem:[%s57 + $0x28] sm:$0xff]
    %v1423 = vld [vmem:[%s57 + $0x30] sm:$0xff]
    %v1424 = vld [vmem:[%s57 + $0x38] sm:$0xff]
    %v1425 = vld [vmem:[%s59] sm:$0x3]
    %v1427 = vperm.slane %v1425, 0
    %v1428 = vperm.slane %v1425, 1
    %v1432 = vsel %vm130, %v1415, 0
    %v1435 = vsel %vm130, %v1416, 0
    %1437 = vmatpush.msra.mxu0 0.0
    %1438 = vmatpush.msra.mxu0 0.0
    %1439 = vmatpush.msra.mxu0 0.0
    %1440 = vmatpush.msra.mxu0 0.0
    %1441 = vmatpush.msra.mxu0 0.0
    %1442 = vmatpush.msra.mxu0 0.0
    %1443 = vmatpush.msra.mxu0 0.0
    %1444 = vmatpush.msra.mxu0 0.0
    %1445 = vmatpush.msra.mxu0 0.0
    %1446 = vmatpush.msra.mxu0 0.0
    %1447 = vmatpush.msra.mxu0 0.0
    %1448 = vmatpush.msra.mxu0 0.0
    %1449 = vmatpush.msra.mxu0 %v1423
    %1450 = vmatpush.msra.mxu0 %v1421
    %1451 = vmatpush.msra.mxu0 %v1419
    %1452 = vmatpush.msra.mxu0 %v1417
    %1453 = vmatmul.f32.gmra.mxu0 %v1432
    %v1454 = vpop.f32.mrf.mxu0
    %v1455 = vadd.f32 %v1427, %v1454
    %1456 = vmatmul.f32.gmra.mxu0 %v1435
    %v1457 = vpop.f32.mrf.mxu0
    %v1458 = vadd.f32 %v1427, %v1457
    %1459 = vdwg.mxu0
    %1460 = vmatpush.msra.mxu0 0.0
    %1461 = vmatpush.msra.mxu0 0.0
    %1462 = vmatpush.msra.mxu0 0.0
    %1463 = vmatpush.msra.mxu0 0.0
    %1464 = vmatpush.msra.mxu0 0.0
    %1465 = vmatpush.msra.mxu0 0.0
    %1466 = vmatpush.msra.mxu0 0.0
    %1467 = vmatpush.msra.mxu0 0.0
    %1468 = vmatpush.msra.mxu0 0.0
    %1469 = vmatpush.msra.mxu0 0.0
    %1470 = vmatpush.msra.mxu0 0.0
    %1471 = vmatpush.msra.mxu0 0.0
    %1472 = vmatpush.msra.mxu0 %v1424
    %1473 = vmatpush.msra.mxu0 %v1422
    %1474 = vmatpush.msra.mxu0 %v1420
    %1475 = vmatpush.msra.mxu0 %v1418
    %1476 = vmatmul.f32.gmra.mxu0 %v1432
    %v1477 = vpop.f32.mrf.mxu0
    %v1478 = vadd.f32 %v1428, %v1477
    %1479 = vmatmul.f32.gmra.mxu0 %v1435
    %v1480 = vpop.f32.mrf.mxu0
    %v1481 = vadd.f32 %v1428, %v1480
    %1482 = vdwg.mxu0
    %1483 = vst [vmem:[#allocation2] sm:$0xff] %v1455
    %1484 = vst [vmem:[#allocation2 + $0x8] sm:$0xff] %v1478
    %1485 = vst [vmem:[#allocation2 + $0x10] sm:$0xff] %v1458
    %1486 = vst [vmem:[#allocation2 + $0x18] sm:$0xff] %v1481
    // Predicated region
    $region122: #{char_embedding_forward.1} parent=1 // pred_check
      _
    $region123: #{char_embedding_forward.1} parent=1 // pred_check_branch
      %1488 = sbr.rel (0) target = $region125
    $region124: #{char_embedding_forward.1} parent=1 // pred_region
      %1490 = vsyncadd [#allocation3], 0
      %s1491 = sshll.u32 [#allocation2], 4
      %s1492 = int_to_ptr.vmem [resolvable:$true] %s1491
      %s1493 = sshll.u32 %s61, 4
      %s1494 = int_to_ptr.hbm [resolvable:$true] %s1493
      %1499 = dma.vmem_to_hbm [thread:$0]  %s1492, 512, %s1494, [#allocation3], 256, 256, 16
    $region125: #{char_embedding_forward.1} parent=1 // pred_fallthru
      _
    // Predicated region
    $region126: #{char_embedding_forward.1} parent=1 // pred_check
      _
    $region127: #{char_embedding_forward.1} parent=1 // pred_check_branch
      %1501 = sbr.rel (0) target = $region129
    $region128: #{char_embedding_forward.1} parent=1 // pred_region
      %1503 = dma.done [#allocation3], 512
    $region129: #{char_embedding_forward.1} parent=1 // pred_fallthru
      _
    %1504 = vsyncpa [#allocation3], 1

</llo_original>
